<compile_context>
chip_gen: v5e
topology: v5e:2x2
jax: 0.10.0
libtpu: 0.0.40
codegen_flags: <defaults>
</compile_context>

<pallas_src>
import functools
import math

import jax
import jax.numpy as jnp
from jax.experimental import pallas as pl
from jax.experimental.pallas import tpu as pltpu

# Module hyper-parameters (from the PyTorch script).
A_THRESH = 0.5        # `a`
P_THRESH = 0.5        # `p`
HIDDEN = 64
INPUT_SIZE = 3
NUM_LAYERS = 3
OUTPUT_SIZE = 3

PAD = 128             # lane-tile width (padded feature / hidden width)
BATCH_PAD = 8         # sublane-tile height (f32)

# Fused per-layer weight layout: 3 lane tiles, switch popped FIRST.
#   tile 0 (cols   0:128): col 0 = switch_i, col 1 = switch_g, rest zero
#   tile 1 (cols 128:256): [ i (lanes 0:64) | f (lanes 64:128) ]
#   tile 2 (cols 256:384): [ g (lanes 0:64) | o (lanes 64:128) ]
N_FUSED = 3 * PAD
COL_SW = 0
COL_I = PAD
COL_F = PAD + HIDDEN
COL_G = 2 * PAD
COL_O = 2 * PAD + HIDDEN

# sigmoid(x) > p  <=>  x > logit(p)   (sigmoid is strictly monotone; exact)
SW_LOGIT = float(math.log(P_THRESH / (1.0 - P_THRESH)))


def lstm_predictor_kernel(x_ref, wx_ref, wh_ref, b_ref, wout_ref, bout_ref,
                          out_ref, seq_ref, xp_ref, *, batch):
    l = pl.program_id(0)
    n_layers = pl.num_programs(0)
    BP, P = out_ref.shape                 # (8, 128)
    T = seq_ref.shape[0] // BP
    B = batch                             # real batch size (switch statistic)
    thr = jnp.float32(B * A_THRESH)

    # Mask so padded batch rows never contribute to the switch counts (hoisted
    # out of the unrolled loops; broadcast_in_dim is not CSE'd by JAX).
    bmask = (jax.lax.broadcasted_iota(jnp.int32, (BP, 2), 0) < B).astype(
        jnp.float32)

    # Layer 0 consumes the padded time-major input; later layers consume the
    # hidden sequence the previous grid step left in seq_ref (VMEM carry).
    @pl.when(l == 0)
    def _():
        seq_ref[...] = x_ref[...]

    # Hoisted input projection (+ bias) for ALL T timesteps of this layer:
    # one (T*BP, 128) @ (128, 384) bf16 matmul off the recurrent chain.
    xp_ref[...] = (
        jnp.dot(seq_ref[...].astype(jnp.bfloat16), wx_ref[0],
                preferred_element_type=jnp.float32)
        + b_ref[0])

    # Recurrent weights: loaded once per layer, reused across the T cells.
    wh_l = wh_ref[0]                      # (128, 384) bf16, weight-stationary

    h = jnp.zeros((BP, P), jnp.float32)
    c = jnp.zeros((BP, P), jnp.float32)
    for t in range(T):                    # fully unrolled; 8-sublane aligned slices
        row = t * BP

        # Single recurrent matmul per cell: K=128, 3 output lane tiles.
        z = xp_ref[row:row + BP, :] + jnp.dot(
            h.astype(jnp.bfloat16), wh_l,
            preferred_element_type=jnp.float32)           # (BP, 384) f32

        # --- switch statistic (tile 0, popped first) ------------------------
        # count(sigmoid(s) > p) == count(s > logit(p)); ONE fused reduce.
        flags = jnp.where(z[:, 0:2] > SW_LOGIT, bmask, 0.0)   # (BP, 2)
        cnts = jnp.sum(flags, axis=0, keepdims=True)           # (1, 2)
        cnt_i = cnts[:, 0:1]
        cnt_g = cnts[:, 1:2]
        use_i = jnp.logical_and(cnt_g < thr, cnt_i > thr)      # strict >/<
        use_g = jnp.logical_and(cnt_g > thr, cnt_i < thr)
        a_i = use_i.astype(jnp.float32)                        # (1, 1) 0/1
        a_g = use_g.astype(jnp.float32)
        a_ig = 1.0 - a_i - a_g          # branches are mutually exclusive

        # --- packed gates (tiles 1 & 2) -------------------------------------
        # Elementwise/EUP math kept in f32 (v5e-safe).  f / o realigned to
        # lanes [0,64) with one XLU roll each; lanes [64,128) of h/c carry
        # bounded garbage that the zero weight rows [64:128) never propagate.
        if_act = jax.nn.sigmoid(z[:, P:2 * P])                 # [ i | f ]
        go_pre = z[:, 2 * P:3 * P]                             # [ g | o ]
        i_gate = if_act
        f_gate = pltpu.roll(if_act, shift=HIDDEN, axis=1)
        g_gate = jnp.tanh(go_pre)
        o_gate = pltpu.roll(jax.nn.sigmoid(go_pre), shift=HIDDEN, axis=1)

        # 0/1 FMA blend of c_next_i / c_next_g / c_next_ig.
        c = f_gate * c + a_i * i_gate + a_g * g_gate + a_ig * (i_gate * g_gate)
        h = o_gate * jnp.tanh(c)

        # This layer's hidden states become the next layer's input sequence.
        seq_ref[row:row + BP, :] = h

    @pl.when(l == n_layers - 1)
    def _():
        # Final projection: wout padded to (128, 128) -> lane-dense store;
        # the wrapper slices [:B, :OUTPUT_SIZE].
        out_ref[...] = (jnp.dot(h.astype(jnp.bfloat16), wout_ref[...],
                                preferred_element_type=jnp.float32)
                        + bout_ref[...])


def init_params(key):
    """Deterministic init matching the PyTorch module's shapes/distributions,
    packed into the fused [switch | i,f | g,o] lane-tile layout."""
    n_keys = NUM_LAYERS * (4 * 2 + 2 * 2) + 2
    keys = iter(jax.random.split(key, n_keys))

    gate_cols = (COL_I, COL_F, COL_G, COL_O)   # PyTorch order: i, f, g, o
    wx_all, wh_all, b_all = [], [], []
    for layer in range(NUM_LAYERS):
        in_dim = INPUT_SIZE if layer == 0 else HIDDEN
        fan_in = in_dim + HIDDEN
        k = 1.0 / (fan_in ** 0.5)

        wx_l = jnp.zeros((PAD, N_FUSED), jnp.float32)   # input / prev-layer-h part
        wh_l = jnp.zeros((PAD, N_FUSED), jnp.float32)   # recurrent-h part
        b_l = jnp.zeros((1, N_FUSED), jnp.float32)

        for col in gate_cols:                           # nn.Linear default init
            w_full = jax.random.uniform(next(keys), (fan_in, HIDDEN),
                                        minval=-k, maxval=k, dtype=jnp.float32)
            b_full = jax.random.uniform(next(keys), (HIDDEN,),
                                        minval=-k, maxval=k, dtype=jnp.float32)
            wx_l = wx_l.at[:in_dim, col:col + HIDDEN].set(w_full[:in_dim])
            wh_l = wh_l.at[:HIDDEN, col:col + HIDDEN].set(w_full[in_dim:])
            b_l = b_l.at[0, col:col + HIDDEN].set(b_full)

        for col in (COL_SW, COL_SW + 1):                # switch_i, switch_g
            w_sw = 0.01 * jax.random.normal(next(keys), (fan_in,),
                                            dtype=jnp.float32)
            b_sw = 0.01 * jax.random.normal(next(keys), (), dtype=jnp.float32)
            wx_l = wx_l.at[:in_dim, col].set(w_sw[:in_dim])
            wh_l = wh_l.at[:HIDDEN, col].set(w_sw[in_dim:])
            b_l = b_l.at[0, col].set(b_sw)

        wx_all.append(wx_l)
        wh_all.append(wh_l)
        b_all.append(b_l)

    k_out = 1.0 / (HIDDEN ** 0.5)
    w_out = jnp.zeros((PAD, PAD), jnp.float32)
    b_out = jnp.zeros((1, PAD), jnp.float32)
    w_out = w_out.at[:HIDDEN, :OUTPUT_SIZE].set(
        jax.random.uniform(next(keys), (HIDDEN, OUTPUT_SIZE),
                           minval=-k_out, maxval=k_out, dtype=jnp.float32))
    b_out = b_out.at[0, :OUTPUT_SIZE].set(
        jax.random.uniform(next(keys), (OUTPUT_SIZE,),
                           minval=-k_out, maxval=k_out, dtype=jnp.float32))

    # Matmul operands in bf16 (native MXU input, half the weight DMA);
    # biases / accumulation / elementwise math stay f32.
    return dict(wx=jnp.stack(wx_all).astype(jnp.bfloat16),
                wh=jnp.stack(wh_all).astype(jnp.bfloat16),
                b=jnp.stack(b_all),                       # (L, 1, N_FUSED) f32
                wout=w_out.astype(jnp.bfloat16),
                bout=b_out)


def lstm_predictor(x, params):
    B, T, F = x.shape
    assert F == INPUT_SIZE and B <= BATCH_PAD
    BP = BATCH_PAD

    # Time-major, batch padded to a full 8-sublane tile, features to a full
    # 128-lane tile, flattened to (T*BP, 128): every per-t row block the
    # kernel touches is vreg-aligned.
    xt = jnp.transpose(x.astype(jnp.float32), (1, 0, 2))          # (T, B, F)
    x_pad = jnp.pad(xt, ((0, 0), (0, BP - B), (0, PAD - F)))      # (T, BP, 128)
    x_flat = x_pad.reshape(T * BP, PAD)

    kernel = functools.partial(lstm_predictor_kernel, batch=B)

    grid_spec = pltpu.PrefetchScalarGridSpec(
        num_scalar_prefetch=0,
        grid=(NUM_LAYERS,),
        in_specs=[
            pl.BlockSpec((T * BP, PAD), lambda l: (0, 0)),          # x (layer 0)
            pl.BlockSpec((1, PAD, N_FUSED), lambda l: (l, 0, 0)),   # wx[l]
            pl.BlockSpec((1, PAD, N_FUSED), lambda l: (l, 0, 0)),   # wh[l]
            pl.BlockSpec((1, 1, N_FUSED), lambda l: (l, 0, 0)),     # b[l]
            pl.BlockSpec((PAD, PAD), lambda l: (0, 0)),             # wout
            pl.BlockSpec((1, PAD), lambda l: (0, 0)),               # bout
        ],
        out_specs=pl.BlockSpec((BP, PAD), lambda l: (0, 0)),
        scratch_shapes=[
            pltpu.VMEM((T * BP, PAD), jnp.float32),      # inter-layer sequence carry
            pltpu.VMEM((T * BP, N_FUSED), jnp.float32),  # hoisted input projections
        ],
    )

    out_pad = pl.pallas_call(
        kernel,
        out_shape=jax.ShapeDtypeStruct((BP, PAD), jnp.float32),
        grid_spec=grid_spec,
        compiler_params=pltpu.CompilerParams(
            dimension_semantics=("arbitrary",)),
    )(x_flat, params["wx"], params["wh"], params["b"],
      params["wout"], params["bout"])

    return out_pad[:B, :OUTPUT_SIZE]


if __name__ == "__main__":
    key = jax.random.PRNGKey(0)
    k_param, k_x = jax.random.split(key)

    params = init_params(k_param)

    B, T = 2, 8
    x = jax.random.normal(k_x, (B, T, INPUT_SIZE), dtype=jnp.float32)

    out = lstm_predictor(x, params)
    jax.block_until_ready(out)
    assert out.shape == (B, OUTPUT_SIZE)
    assert bool(jnp.all(jnp.isfinite(out)))
    print("KERNEL_OK")
</pallas_src>

<mosaic_0001>
module attributes {stable_mosaic.version = 11 : i64} {
  func.func @lstm_predictor_kernel(%arg0: i32, %arg1: memref<64x128xf32, #tpu.memory_space<vmem>>, %arg2: memref<1x128x384xbf16, #tpu.memory_space<vmem>>, %arg3: memref<1x128x384xbf16, #tpu.memory_space<vmem>>, %arg4: memref<1x1x384xf32, #tpu.memory_space<vmem>>, %arg5: memref<128x128xbf16, #tpu.memory_space<vmem>>, %arg6: memref<1x128xf32, #tpu.memory_space<vmem>>, %arg7: memref<8x128xf32, #tpu.memory_space<vmem>>, %arg8: memref<64x128xf32, #tpu.memory_space<vmem>>, %arg9: memref<64x384xf32, #tpu.memory_space<vmem>>) attributes {dimension_semantics = [#tpu.dimension_semantics<arbitrary>], iteration_bounds = array<i64: 3>, scalar_prefetch = 0 : i64, scratch_operands = 2 : i64, tpu.core_type = #tpu.core_type<tc>, window_params = [{pipeline_mode = #tpu.pipeline_mode<synchronous>, transform_indices = @transform_0, window_bounds = array<i64: 64, 128>}, {transform_indices = @transform_1, window_bounds = array<i64: 1, 128, 384>}, {transform_indices = @transform_2, window_bounds = array<i64: 1, 128, 384>}, {transform_indices = @transform_3, window_bounds = array<i64: 1, 1, 384>}, {pipeline_mode = #tpu.pipeline_mode<synchronous>, transform_indices = @transform_4, window_bounds = array<i64: 128, 128>}, {pipeline_mode = #tpu.pipeline_mode<synchronous>, transform_indices = @transform_5, window_bounds = array<i64: 1, 128>}, {pipeline_mode = #tpu.pipeline_mode<synchronous>, transform_indices = @transform_6, window_bounds = array<i64: 8, 128>}]} {
    %0 = tpu.iota {dimensions = array<i32: 0>} : vector<8x2xi32>
    %c2_i32 = arith.constant 2 : i32
    %1 = vector.broadcast %c2_i32 : i32 to vector<8x2xi32>
    %2 = arith.cmpi slt, %0, %1 : vector<8x2xi32>
    %3 = arith.extui %2 : vector<8x2xi1> to vector<8x2xi32>
    %4 = arith.sitofp %3 : vector<8x2xi32> to vector<8x2xf32>
    %c0_i32 = arith.constant 0 : i32
    %5 = arith.cmpi eq, %arg0, %c0_i32 : i32
    %6 = arith.extui %5 : i1 to i32
    %c0_i32_0 = arith.constant 0 : i32
    %7 = arith.cmpi ne, %6, %c0_i32_0 : i32
    scf.if %7 {
      %c0_145 = arith.constant 0 : index
      %c0_146 = arith.constant 0 : index
      %497 = vector.load %arg1[%c0_145, %c0_146] : memref<64x128xf32, #tpu.memory_space<vmem>>, vector<64x128xf32>
      %c0_147 = arith.constant 0 : index
      %c0_148 = arith.constant 0 : index
      %498 = vector.load %arg8[%c0_147, %c0_148] : memref<64x128xf32, #tpu.memory_space<vmem>>, vector<64x128xf32>
      tpu.vector_store %arg8[%c0_147, %c0_148], %497 {strides = array<i32>} : memref<64x128xf32, #tpu.memory_space<vmem>>, vector<64x128xf32>,
    } else {
    }
    %c0 = arith.constant 0 : index
    %c0_1 = arith.constant 0 : index
    %8 = vector.load %arg8[%c0, %c0_1] : memref<64x128xf32, #tpu.memory_space<vmem>>, vector<64x128xf32>
    %9 = arith.truncf %8 : vector<64x128xf32> to vector<64x128xbf16>
    %c0_2 = arith.constant 0 : index
    %c0_3 = arith.constant 0 : index
    %c0_4 = arith.constant 0 : index
    %10 = vector.load %arg2[%c0_2, %c0_3, %c0_4] : memref<1x128x384xbf16, #tpu.memory_space<vmem>>, vector<1x128x384xbf16>
    %11 = vector.shape_cast %10 : vector<1x128x384xbf16> to vector<128x384xbf16>
    %cst = arith.constant dense<0.000000e+00> : vector<64x384xf32>
    %12 = tpu.matmul %9, %11, %cst {dimension_numbers = #tpu.dot_dimension_numbers<[1], [0], [0], [1], [0, 0, 1, 1], [], []>} : vector<64x128xbf16>, vector<128x384xbf16>, vector<64x384xf32> -> vector<64x384xf32>
    %c0_5 = arith.constant 0 : index
    %c0_6 = arith.constant 0 : index
    %c0_7 = arith.constant 0 : index
    %13 = vector.load %arg4[%c0_5, %c0_6, %c0_7] : memref<1x1x384xf32, #tpu.memory_space<vmem>>, vector<1x1x384xf32>
    %14 = vector.shape_cast %13 : vector<1x1x384xf32> to vector<1x384xf32>
    %15 = vector.broadcast %14 : vector<1x384xf32> to vector<64x384xf32>
    %16 = arith.addf %12, %15 : vector<64x384xf32>
    %c0_8 = arith.constant 0 : index
    %c0_9 = arith.constant 0 : index
    %17 = vector.load %arg9[%c0_8, %c0_9] : memref<64x384xf32, #tpu.memory_space<vmem>>, vector<64x384xf32>
    tpu.vector_store %arg9[%c0_8, %c0_9], %16 {strides = array<i32>} : memref<64x384xf32, #tpu.memory_space<vmem>>, vector<64x384xf32>,
    %c0_10 = arith.constant 0 : index
    %c0_11 = arith.constant 0 : index
    %c0_12 = arith.constant 0 : index
    %18 = vector.load %arg3[%c0_10, %c0_11, %c0_12] : memref<1x128x384xbf16, #tpu.memory_space<vmem>>, vector<1x128x384xbf16>
    %19 = vector.shape_cast %18 : vector<1x128x384xbf16> to vector<128x384xbf16>
    %cst_13 = arith.constant 0.000000e+00 : f32
    %20 = vector.broadcast %cst_13 : f32 to vector<8x128xf32>
    %cst_14 = arith.constant 0.000000e+00 : f32
    %21 = vector.broadcast %cst_14 : f32 to vector<8x128xf32>
    %c0_15 = arith.constant 0 : index
    %c0_16 = arith.constant 0 : index
    %22 = vector.load %arg9[%c0_15, %c0_16] : memref<64x384xf32, #tpu.memory_space<vmem>>, vector<8x384xf32>
    %23 = arith.truncf %20 : vector<8x128xf32> to vector<8x128xbf16>
    %cst_17 = arith.constant dense<0.000000e+00> : vector<8x384xf32>
    %24 = tpu.matmul %23, %19, %cst_17 {dimension_numbers = #tpu.dot_dimension_numbers<[1], [0], [0], [1], [0, 0, 1, 1], [], []>} : vector<8x128xbf16>, vector<128x384xbf16>, vector<8x384xf32> -> vector<8x384xf32>
    %25 = arith.addf %22, %24 : vector<8x384xf32>
    %26 = vector.extract_strided_slice %25 {offsets = [0, 0], sizes = [8, 2], strides = [1, 1]} : vector<8x384xf32> to vector<8x2xf32>
    %cst_18 = arith.constant 0.000000e+00 : f32
    %27 = vector.broadcast %cst_18 : f32 to vector<8x2xf32>
    %28 = arith.cmpf ogt, %26, %27 : vector<8x2xf32>
    %cst_19 = arith.constant 0.000000e+00 : f32
    %29 = vector.broadcast %cst_19 : f32 to vector<8x2xf32>
    %30 = arith.select %28, %4, %29 : vector<8x2xi1>, vector<8x2xf32>
    %cst_20 = arith.constant dense<0.000000e+00> : vector<2xf32>
    %31 = vector.multi_reduction <add>, %30, %cst_20 [0] : vector<8x2xf32> to vector<2xf32>
    %32 = vector.shape_cast %31 : vector<2xf32> to vector<1x2xf32>
    %33 = vector.extract_strided_slice %32 {offsets = [0, 0], sizes = [1, 1], strides = [1, 1]} : vector<1x2xf32> to vector<1x1xf32>
    %34 = vector.extract_strided_slice %32 {offsets = [0, 1], sizes = [1, 1], strides = [1, 1]} : vector<1x2xf32> to vector<1x1xf32>
    %cst_21 = arith.constant 1.000000e+00 : f32
    %35 = vector.broadcast %cst_21 : f32 to vector<1x1xf32>
    %36 = arith.cmpf olt, %34, %35 : vector<1x1xf32>
    %cst_22 = arith.constant 1.000000e+00 : f32
    %37 = vector.broadcast %cst_22 : f32 to vector<1x1xf32>
    %38 = arith.cmpf ogt, %33, %37 : vector<1x1xf32>
    %39 = arith.andi %36, %38 : vector<1x1xi1>
    %cst_23 = arith.constant 1.000000e+00 : f32
    %40 = vector.broadcast %cst_23 : f32 to vector<1x1xf32>
    %41 = arith.cmpf ogt, %34, %40 : vector<1x1xf32>
    %cst_24 = arith.constant 1.000000e+00 : f32
    %42 = vector.broadcast %cst_24 : f32 to vector<1x1xf32>
    %43 = arith.cmpf olt, %33, %42 : vector<1x1xf32>
    %44 = arith.andi %41, %43 : vector<1x1xi1>
    %45 = arith.extui %39 : vector<1x1xi1> to vector<1x1xi32>
    %46 = arith.sitofp %45 : vector<1x1xi32> to vector<1x1xf32>
    %47 = arith.extui %44 : vector<1x1xi1> to vector<1x1xi32>
    %48 = arith.sitofp %47 : vector<1x1xi32> to vector<1x1xf32>
    %cst_25 = arith.constant 1.000000e+00 : f32
    %49 = vector.broadcast %cst_25 : f32 to vector<1x1xf32>
    %50 = arith.subf %49, %46 : vector<1x1xf32>
    %51 = arith.subf %50, %48 : vector<1x1xf32>
    %52 = vector.extract_strided_slice %25 {offsets = [0, 128], sizes = [8, 128], strides = [1, 1]} : vector<8x384xf32> to vector<8x128xf32>
    %53 = arith.negf %52 : vector<8x128xf32>
    %54 = math.exp %53 : vector<8x128xf32>
    %cst_26 = arith.constant 1.000000e+00 : f32
    %55 = vector.broadcast %cst_26 : f32 to vector<8x128xf32>
    %56 = arith.addf %55, %54 : vector<8x128xf32>
    %57 = arith.divf %55, %56 : vector<8x128xf32>
    %58 = vector.extract_strided_slice %25 {offsets = [0, 256], sizes = [8, 128], strides = [1, 1]} : vector<8x384xf32> to vector<8x128xf32>
    %c64_i32 = arith.constant 64 : i32
    %59 = tpu.dynamic_rotate %57 by %c64_i32 dim 1 : vector<8x128xf32>, i32 -> vector<8x128xf32>
    %60 = math.tanh %58 : vector<8x128xf32>
    %61 = arith.negf %58 : vector<8x128xf32>
    %62 = math.exp %61 : vector<8x128xf32>
    %cst_27 = arith.constant 1.000000e+00 : f32
    %63 = vector.broadcast %cst_27 : f32 to vector<8x128xf32>
    %64 = arith.addf %63, %62 : vector<8x128xf32>
    %65 = arith.divf %63, %64 : vector<8x128xf32>
    %c64_i32_28 = arith.constant 64 : i32
    %66 = tpu.dynamic_rotate %65 by %c64_i32_28 dim 1 : vector<8x128xf32>, i32 -> vector<8x128xf32>
    %67 = arith.mulf %59, %21 : vector<8x128xf32>
    %68 = vector.broadcast %46 : vector<1x1xf32> to vector<8x128xf32>
    %69 = arith.mulf %68, %57 : vector<8x128xf32>
    %70 = arith.addf %67, %69 : vector<8x128xf32>
    %71 = vector.broadcast %48 : vector<1x1xf32> to vector<8x128xf32>
    %72 = arith.mulf %71, %60 : vector<8x128xf32>
    %73 = arith.addf %70, %72 : vector<8x128xf32>
    %74 = arith.mulf %57, %60 : vector<8x128xf32>
    %75 = vector.broadcast %51 : vector<1x1xf32> to vector<8x128xf32>
    %76 = arith.mulf %75, %74 : vector<8x128xf32>
    %77 = arith.addf %73, %76 : vector<8x128xf32>
    %78 = math.tanh %77 : vector<8x128xf32>
    %79 = arith.mulf %66, %78 : vector<8x128xf32>
    %c0_29 = arith.constant 0 : index
    %c0_30 = arith.constant 0 : index
    %80 = vector.load %arg8[%c0_29, %c0_30] : memref<64x128xf32, #tpu.memory_space<vmem>>, vector<8x128xf32>
    tpu.vector_store %arg8[%c0_29, %c0_30], %79 {strides = array<i32>} : memref<64x128xf32, #tpu.memory_space<vmem>>, vector<8x128xf32>,
    %c8 = arith.constant 8 : index
    %c0_31 = arith.constant 0 : index
    %81 = vector.load %arg9[%c8, %c0_31] : memref<64x384xf32, #tpu.memory_space<vmem>>, vector<8x384xf32>
    %82 = arith.truncf %79 : vector<8x128xf32> to vector<8x128xbf16>
    %cst_32 = arith.constant dense<0.000000e+00> : vector<8x384xf32>
    %83 = tpu.matmul %82, %19, %cst_32 {dimension_numbers = #tpu.dot_dimension_numbers<[1], [0], [0], [1], [0, 0, 1, 1], [], []>} : vector<8x128xbf16>, vector<128x384xbf16>, vector<8x384xf32> -> vector<8x384xf32>
    %84 = arith.addf %81, %83 : vector<8x384xf32>
    %85 = vector.extract_strided_slice %84 {offsets = [0, 0], sizes = [8, 2], strides = [1, 1]} : vector<8x384xf32> to vector<8x2xf32>
    %cst_33 = arith.constant 0.000000e+00 : f32
    %86 = vector.broadcast %cst_33 : f32 to vector<8x2xf32>
    %87 = arith.cmpf ogt, %85, %86 : vector<8x2xf32>
    %cst_34 = arith.constant 0.000000e+00 : f32
    %88 = vector.broadcast %cst_34 : f32 to vector<8x2xf32>
    %89 = arith.select %87, %4, %88 : vector<8x2xi1>, vector<8x2xf32>
    %cst_35 = arith.constant dense<0.000000e+00> : vector<2xf32>
    %90 = vector.multi_reduction <add>, %89, %cst_35 [0] : vector<8x2xf32> to vector<2xf32>
    %91 = vector.shape_cast %90 : vector<2xf32> to vector<1x2xf32>
    %92 = vector.extract_strided_slice %91 {offsets = [0, 0], sizes = [1, 1], strides = [1, 1]} : vector<1x2xf32> to vector<1x1xf32>
    %93 = vector.extract_strided_slice %91 {offsets = [0, 1], sizes = [1, 1], strides = [1, 1]} : vector<1x2xf32> to vector<1x1xf32>
    %cst_36 = arith.constant 1.000000e+00 : f32
    %94 = vector.broadcast %cst_36 : f32 to vector<1x1xf32>
    %95 = arith.cmpf olt, %93, %94 : vector<1x1xf32>
    %cst_37 = arith.constant 1.000000e+00 : f32
    %96 = vector.broadcast %cst_37 : f32 to vector<1x1xf32>
    %97 = arith.cmpf ogt, %92, %96 : vector<1x1xf32>
    %98 = arith.andi %95, %97 : vector<1x1xi1>
    %cst_38 = arith.constant 1.000000e+00 : f32
    %99 = vector.broadcast %cst_38 : f32 to vector<1x1xf32>
    %100 = arith.cmpf ogt, %93, %99 : vector<1x1xf32>
    %cst_39 = arith.constant 1.000000e+00 : f32
    %101 = vector.broadcast %cst_39 : f32 to vector<1x1xf32>
    %102 = arith.cmpf olt, %92, %101 : vector<1x1xf32>
    %103 = arith.andi %100, %102 : vector<1x1xi1>
    %104 = arith.extui %98 : vector<1x1xi1> to vector<1x1xi32>
    %105 = arith.sitofp %104 : vector<1x1xi32> to vector<1x1xf32>
    %106 = arith.extui %103 : vector<1x1xi1> to vector<1x1xi32>
    %107 = arith.sitofp %106 : vector<1x1xi32> to vector<1x1xf32>
    %cst_40 = arith.constant 1.000000e+00 : f32
    %108 = vector.broadcast %cst_40 : f32 to vector<1x1xf32>
    %109 = arith.subf %108, %105 : vector<1x1xf32>
    %110 = arith.subf %109, %107 : vector<1x1xf32>
    %111 = vector.extract_strided_slice %84 {offsets = [0, 128], sizes = [8, 128], strides = [1, 1]} : vector<8x384xf32> to vector<8x128xf32>
    %112 = arith.negf %111 : vector<8x128xf32>
    %113 = math.exp %112 : vector<8x128xf32>
    %cst_41 = arith.constant 1.000000e+00 : f32
    %114 = vector.broadcast %cst_41 : f32 to vector<8x128xf32>
    %115 = arith.addf %114, %113 : vector<8x128xf32>
    %116 = arith.divf %114, %115 : vector<8x128xf32>
    %117 = vector.extract_strided_slice %84 {offsets = [0, 256], sizes = [8, 128], strides = [1, 1]} : vector<8x384xf32> to vector<8x128xf32>
    %c64_i32_42 = arith.constant 64 : i32
    %118 = tpu.dynamic_rotate %116 by %c64_i32_42 dim 1 : vector<8x128xf32>, i32 -> vector<8x128xf32>
    %119 = math.tanh %117 : vector<8x128xf32>
    %120 = arith.negf %117 : vector<8x128xf32>
    %121 = math.exp %120 : vector<8x128xf32>
    %cst_43 = arith.constant 1.000000e+00 : f32
    %122 = vector.broadcast %cst_43 : f32 to vector<8x128xf32>
    %123 = arith.addf %122, %121 : vector<8x128xf32>
    %124 = arith.divf %122, %123 : vector<8x128xf32>
    %c64_i32_44 = arith.constant 64 : i32
    %125 = tpu.dynamic_rotate %124 by %c64_i32_44 dim 1 : vector<8x128xf32>, i32 -> vector<8x128xf32>
    %126 = arith.mulf %118, %77 : vector<8x128xf32>
    %127 = vector.broadcast %105 : vector<1x1xf32> to vector<8x128xf32>
    %128 = arith.mulf %127, %116 : vector<8x128xf32>
    %129 = arith.addf %126, %128 : vector<8x128xf32>
    %130 = vector.broadcast %107 : vector<1x1xf32> to vector<8x128xf32>
    %131 = arith.mulf %130, %119 : vector<8x128xf32>
    %132 = arith.addf %129, %131 : vector<8x128xf32>
    %133 = arith.mulf %116, %119 : vector<8x128xf32>
    %134 = vector.broadcast %110 : vector<1x1xf32> to vector<8x128xf32>
    %135 = arith.mulf %134, %133 : vector<8x128xf32>
    %136 = arith.addf %132, %135 : vector<8x128xf32>
    %137 = math.tanh %136 : vector<8x128xf32>
    %138 = arith.mulf %125, %137 : vector<8x128xf32>
    %c8_45 = arith.constant 8 : index
    %c0_46 = arith.constant 0 : index
    %139 = vector.load %arg8[%c8_45, %c0_46] : memref<64x128xf32, #tpu.memory_space<vmem>>, vector<8x128xf32>
    tpu.vector_store %arg8[%c8_45, %c0_46], %138 {strides = array<i32>} : memref<64x128xf32, #tpu.memory_space<vmem>>, vector<8x128xf32>,
    %c16 = arith.constant 16 : index
    %c0_47 = arith.constant 0 : index
    %140 = vector.load %arg9[%c16, %c0_47] : memref<64x384xf32, #tpu.memory_space<vmem>>, vector<8x384xf32>
    %141 = arith.truncf %138 : vector<8x128xf32> to vector<8x128xbf16>
    %cst_48 = arith.constant dense<0.000000e+00> : vector<8x384xf32>
    %142 = tpu.matmul %141, %19, %cst_48 {dimension_numbers = #tpu.dot_dimension_numbers<[1], [0], [0], [1], [0, 0, 1, 1], [], []>} : vector<8x128xbf16>, vector<128x384xbf16>, vector<8x384xf32> -> vector<8x384xf32>
    %143 = arith.addf %140, %142 : vector<8x384xf32>
    %144 = vector.extract_strided_slice %143 {offsets = [0, 0], sizes = [8, 2], strides = [1, 1]} : vector<8x384xf32> to vector<8x2xf32>
    %cst_49 = arith.constant 0.000000e+00 : f32
    %145 = vector.broadcast %cst_49 : f32 to vector<8x2xf32>
    %146 = arith.cmpf ogt, %144, %145 : vector<8x2xf32>
    %cst_50 = arith.constant 0.000000e+00 : f32
    %147 = vector.broadcast %cst_50 : f32 to vector<8x2xf32>
    %148 = arith.select %146, %4, %147 : vector<8x2xi1>, vector<8x2xf32>
    %cst_51 = arith.constant dense<0.000000e+00> : vector<2xf32>
    %149 = vector.multi_reduction <add>, %148, %cst_51 [0] : vector<8x2xf32> to vector<2xf32>
    %150 = vector.shape_cast %149 : vector<2xf32> to vector<1x2xf32>
    %151 = vector.extract_strided_slice %150 {offsets = [0, 0], sizes = [1, 1], strides = [1, 1]} : vector<1x2xf32> to vector<1x1xf32>
    %152 = vector.extract_strided_slice %150 {offsets = [0, 1], sizes = [1, 1], strides = [1, 1]} : vector<1x2xf32> to vector<1x1xf32>
    %cst_52 = arith.constant 1.000000e+00 : f32
    %153 = vector.broadcast %cst_52 : f32 to vector<1x1xf32>
    %154 = arith.cmpf olt, %152, %153 : vector<1x1xf32>
    %cst_53 = arith.constant 1.000000e+00 : f32
    %155 = vector.broadcast %cst_53 : f32 to vector<1x1xf32>
    %156 = arith.cmpf ogt, %151, %155 : vector<1x1xf32>
    %157 = arith.andi %154, %156 : vector<1x1xi1>
    %cst_54 = arith.constant 1.000000e+00 : f32
    %158 = vector.broadcast %cst_54 : f32 to vector<1x1xf32>
    %159 = arith.cmpf ogt, %152, %158 : vector<1x1xf32>
    %cst_55 = arith.constant 1.000000e+00 : f32
    %160 = vector.broadcast %cst_55 : f32 to vector<1x1xf32>
    %161 = arith.cmpf olt, %151, %160 : vector<1x1xf32>
    %162 = arith.andi %159, %161 : vector<1x1xi1>
    %163 = arith.extui %157 : vector<1x1xi1> to vector<1x1xi32>
    %164 = arith.sitofp %163 : vector<1x1xi32> to vector<1x1xf32>
    %165 = arith.extui %162 : vector<1x1xi1> to vector<1x1xi32>
    %166 = arith.sitofp %165 : vector<1x1xi32> to vector<1x1xf32>
    %cst_56 = arith.constant 1.000000e+00 : f32
    %167 = vector.broadcast %cst_56 : f32 to vector<1x1xf32>
    %168 = arith.subf %167, %164 : vector<1x1xf32>
    %169 = arith.subf %168, %166 : vector<1x1xf32>
    %170 = vector.extract_strided_slice %143 {offsets = [0, 128], sizes = [8, 128], strides = [1, 1]} : vector<8x384xf32> to vector<8x128xf32>
    %171 = arith.negf %170 : vector<8x128xf32>
    %172 = math.exp %171 : vector<8x128xf32>
    %cst_57 = arith.constant 1.000000e+00 : f32
    %173 = vector.broadcast %cst_57 : f32 to vector<8x128xf32>
    %174 = arith.addf %173, %172 : vector<8x128xf32>
    %175 = arith.divf %173, %174 : vector<8x128xf32>
    %176 = vector.extract_strided_slice %143 {offsets = [0, 256], sizes = [8, 128], strides = [1, 1]} : vector<8x384xf32> to vector<8x128xf32>
    %c64_i32_58 = arith.constant 64 : i32
    %177 = tpu.dynamic_rotate %175 by %c64_i32_58 dim 1 : vector<8x128xf32>, i32 -> vector<8x128xf32>
    %178 = math.tanh %176 : vector<8x128xf32>
    %179 = arith.negf %176 : vector<8x128xf32>
    %180 = math.exp %179 : vector<8x128xf32>
    %cst_59 = arith.constant 1.000000e+00 : f32
    %181 = vector.broadcast %cst_59 : f32 to vector<8x128xf32>
    %182 = arith.addf %181, %180 : vector<8x128xf32>
    %183 = arith.divf %181, %182 : vector<8x128xf32>
    %c64_i32_60 = arith.constant 64 : i32
    %184 = tpu.dynamic_rotate %183 by %c64_i32_60 dim 1 : vector<8x128xf32>, i32 -> vector<8x128xf32>
    %185 = arith.mulf %177, %136 : vector<8x128xf32>
    %186 = vector.broadcast %164 : vector<1x1xf32> to vector<8x128xf32>
    %187 = arith.mulf %186, %175 : vector<8x128xf32>
    %188 = arith.addf %185, %187 : vector<8x128xf32>
    %189 = vector.broadcast %166 : vector<1x1xf32> to vector<8x128xf32>
    %190 = arith.mulf %189, %178 : vector<8x128xf32>
    %191 = arith.addf %188, %190 : vector<8x128xf32>
    %192 = arith.mulf %175, %178 : vector<8x128xf32>
    %193 = vector.broadcast %169 : vector<1x1xf32> to vector<8x128xf32>
    %194 = arith.mulf %193, %192 : vector<8x128xf32>
    %195 = arith.addf %191, %194 : vector<8x128xf32>
    %196 = math.tanh %195 : vector<8x128xf32>
    %197 = arith.mulf %184, %196 : vector<8x128xf32>
    %c16_61 = arith.constant 16 : index
    %c0_62 = arith.constant 0 : index
    %198 = vector.load %arg8[%c16_61, %c0_62] : memref<64x128xf32, #tpu.memory_space<vmem>>, vector<8x128xf32>
    tpu.vector_store %arg8[%c16_61, %c0_62], %197 {strides = array<i32>} : memref<64x128xf32, #tpu.memory_space<vmem>>, vector<8x128xf32>,
    %c24 = arith.constant 24 : index
    %c0_63 = arith.constant 0 : index
    %199 = vector.load %arg9[%c24, %c0_63] : memref<64x384xf32, #tpu.memory_space<vmem>>, vector<8x384xf32>
    %200 = arith.truncf %197 : vector<8x128xf32> to vector<8x128xbf16>
    %cst_64 = arith.constant dense<0.000000e+00> : vector<8x384xf32>
    %201 = tpu.matmul %200, %19, %cst_64 {dimension_numbers = #tpu.dot_dimension_numbers<[1], [0], [0], [1], [0, 0, 1, 1], [], []>} : vector<8x128xbf16>, vector<128x384xbf16>, vector<8x384xf32> -> vector<8x384xf32>
    %202 = arith.addf %199, %201 : vector<8x384xf32>
    %203 = vector.extract_strided_slice %202 {offsets = [0, 0], sizes = [8, 2], strides = [1, 1]} : vector<8x384xf32> to vector<8x2xf32>
    %cst_65 = arith.constant 0.000000e+00 : f32
    %204 = vector.broadcast %cst_65 : f32 to vector<8x2xf32>
    %205 = arith.cmpf ogt, %203, %204 : vector<8x2xf32>
    %cst_66 = arith.constant 0.000000e+00 : f32
    %206 = vector.broadcast %cst_66 : f32 to vector<8x2xf32>
    %207 = arith.select %205, %4, %206 : vector<8x2xi1>, vector<8x2xf32>
    %cst_67 = arith.constant dense<0.000000e+00> : vector<2xf32>
    %208 = vector.multi_reduction <add>, %207, %cst_67 [0] : vector<8x2xf32> to vector<2xf32>
    %209 = vector.shape_cast %208 : vector<2xf32> to vector<1x2xf32>
    %210 = vector.extract_strided_slice %209 {offsets = [0, 0], sizes = [1, 1], strides = [1, 1]} : vector<1x2xf32> to vector<1x1xf32>
    %211 = vector.extract_strided_slice %209 {offsets = [0, 1], sizes = [1, 1], strides = [1, 1]} : vector<1x2xf32> to vector<1x1xf32>
    %cst_68 = arith.constant 1.000000e+00 : f32
    %212 = vector.broadcast %cst_68 : f32 to vector<1x1xf32>
    %213 = arith.cmpf olt, %211, %212 : vector<1x1xf32>
    %cst_69 = arith.constant 1.000000e+00 : f32
    %214 = vector.broadcast %cst_69 : f32 to vector<1x1xf32>
    %215 = arith.cmpf ogt, %210, %214 : vector<1x1xf32>
    %216 = arith.andi %213, %215 : vector<1x1xi1>
    %cst_70 = arith.constant 1.000000e+00 : f32
    %217 = vector.broadcast %cst_70 : f32 to vector<1x1xf32>
    %218 = arith.cmpf ogt, %211, %217 : vector<1x1xf32>
    %cst_71 = arith.constant 1.000000e+00 : f32
    %219 = vector.broadcast %cst_71 : f32 to vector<1x1xf32>
    %220 = arith.cmpf olt, %210, %219 : vector<1x1xf32>
    %221 = arith.andi %218, %220 : vector<1x1xi1>
    %222 = arith.extui %216 : vector<1x1xi1> to vector<1x1xi32>
    %223 = arith.sitofp %222 : vector<1x1xi32> to vector<1x1xf32>
    %224 = arith.extui %221 : vector<1x1xi1> to vector<1x1xi32>
    %225 = arith.sitofp %224 : vector<1x1xi32> to vector<1x1xf32>
    %cst_72 = arith.constant 1.000000e+00 : f32
    %226 = vector.broadcast %cst_72 : f32 to vector<1x1xf32>
    %227 = arith.subf %226, %223 : vector<1x1xf32>
    %228 = arith.subf %227, %225 : vector<1x1xf32>
    %229 = vector.extract_strided_slice %202 {offsets = [0, 128], sizes = [8, 128], strides = [1, 1]} : vector<8x384xf32> to vector<8x128xf32>
    %230 = arith.negf %229 : vector<8x128xf32>
    %231 = math.exp %230 : vector<8x128xf32>
    %cst_73 = arith.constant 1.000000e+00 : f32
    %232 = vector.broadcast %cst_73 : f32 to vector<8x128xf32>
    %233 = arith.addf %232, %231 : vector<8x128xf32>
    %234 = arith.divf %232, %233 : vector<8x128xf32>
    %235 = vector.extract_strided_slice %202 {offsets = [0, 256], sizes = [8, 128], strides = [1, 1]} : vector<8x384xf32> to vector<8x128xf32>
    %c64_i32_74 = arith.constant 64 : i32
    %236 = tpu.dynamic_rotate %234 by %c64_i32_74 dim 1 : vector<8x128xf32>, i32 -> vector<8x128xf32>
    %237 = math.tanh %235 : vector<8x128xf32>
    %238 = arith.negf %235 : vector<8x128xf32>
    %239 = math.exp %238 : vector<8x128xf32>
    %cst_75 = arith.constant 1.000000e+00 : f32
    %240 = vector.broadcast %cst_75 : f32 to vector<8x128xf32>
    %241 = arith.addf %240, %239 : vector<8x128xf32>
    %242 = arith.divf %240, %241 : vector<8x128xf32>
    %c64_i32_76 = arith.constant 64 : i32
    %243 = tpu.dynamic_rotate %242 by %c64_i32_76 dim 1 : vector<8x128xf32>, i32 -> vector<8x128xf32>
    %244 = arith.mulf %236, %195 : vector<8x128xf32>
    %245 = vector.broadcast %223 : vector<1x1xf32> to vector<8x128xf32>
    %246 = arith.mulf %245, %234 : vector<8x128xf32>
    %247 = arith.addf %244, %246 : vector<8x128xf32>
    %248 = vector.broadcast %225 : vector<1x1xf32> to vector<8x128xf32>
    %249 = arith.mulf %248, %237 : vector<8x128xf32>
    %250 = arith.addf %247, %249 : vector<8x128xf32>
    %251 = arith.mulf %234, %237 : vector<8x128xf32>
    %252 = vector.broadcast %228 : vector<1x1xf32> to vector<8x128xf32>
    %253 = arith.mulf %252, %251 : vector<8x128xf32>
    %254 = arith.addf %250, %253 : vector<8x128xf32>
    %255 = math.tanh %254 : vector<8x128xf32>
    %256 = arith.mulf %243, %255 : vector<8x128xf32>
    %c24_77 = arith.constant 24 : index
    %c0_78 = arith.constant 0 : index
    %257 = vector.load %arg8[%c24_77, %c0_78] : memref<64x128xf32, #tpu.memory_space<vmem>>, vector<8x128xf32>
    tpu.vector_store %arg8[%c24_77, %c0_78], %256 {strides = array<i32>} : memref<64x128xf32, #tpu.memory_space<vmem>>, vector<8x128xf32>,
    %c32 = arith.constant 32 : index
    %c0_79 = arith.constant 0 : index
    %258 = vector.load %arg9[%c32, %c0_79] : memref<64x384xf32, #tpu.memory_space<vmem>>, vector<8x384xf32>
    %259 = arith.truncf %256 : vector<8x128xf32> to vector<8x128xbf16>
    %cst_80 = arith.constant dense<0.000000e+00> : vector<8x384xf32>
    %260 = tpu.matmul %259, %19, %cst_80 {dimension_numbers = #tpu.dot_dimension_numbers<[1], [0], [0], [1], [0, 0, 1, 1], [], []>} : vector<8x128xbf16>, vector<128x384xbf16>, vector<8x384xf32> -> vector<8x384xf32>
    %261 = arith.addf %258, %260 : vector<8x384xf32>
    %262 = vector.extract_strided_slice %261 {offsets = [0, 0], sizes = [8, 2], strides = [1, 1]} : vector<8x384xf32> to vector<8x2xf32>
    %cst_81 = arith.constant 0.000000e+00 : f32
    %263 = vector.broadcast %cst_81 : f32 to vector<8x2xf32>
    %264 = arith.cmpf ogt, %262, %263 : vector<8x2xf32>
    %cst_82 = arith.constant 0.000000e+00 : f32
    %265 = vector.broadcast %cst_82 : f32 to vector<8x2xf32>
    %266 = arith.select %264, %4, %265 : vector<8x2xi1>, vector<8x2xf32>
    %cst_83 = arith.constant dense<0.000000e+00> : vector<2xf32>
    %267 = vector.multi_reduction <add>, %266, %cst_83 [0] : vector<8x2xf32> to vector<2xf32>
    %268 = vector.shape_cast %267 : vector<2xf32> to vector<1x2xf32>
    %269 = vector.extract_strided_slice %268 {offsets = [0, 0], sizes = [1, 1], strides = [1, 1]} : vector<1x2xf32> to vector<1x1xf32>
    %270 = vector.extract_strided_slice %268 {offsets = [0, 1], sizes = [1, 1], strides = [1, 1]} : vector<1x2xf32> to vector<1x1xf32>
    %cst_84 = arith.constant 1.000000e+00 : f32
    %271 = vector.broadcast %cst_84 : f32 to vector<1x1xf32>
    %272 = arith.cmpf olt, %270, %271 : vector<1x1xf32>
    %cst_85 = arith.constant 1.000000e+00 : f32
    %273 = vector.broadcast %cst_85 : f32 to vector<1x1xf32>
    %274 = arith.cmpf ogt, %269, %273 : vector<1x1xf32>
    %275 = arith.andi %272, %274 : vector<1x1xi1>
    %cst_86 = arith.constant 1.000000e+00 : f32
    %276 = vector.broadcast %cst_86 : f32 to vector<1x1xf32>
    %277 = arith.cmpf ogt, %270, %276 : vector<1x1xf32>
    %cst_87 = arith.constant 1.000000e+00 : f32
    %278 = vector.broadcast %cst_87 : f32 to vector<1x1xf32>
    %279 = arith.cmpf olt, %269, %278 : vector<1x1xf32>
    %280 = arith.andi %277, %279 : vector<1x1xi1>
    %281 = arith.extui %275 : vector<1x1xi1> to vector<1x1xi32>
    %282 = arith.sitofp %281 : vector<1x1xi32> to vector<1x1xf32>
    %283 = arith.extui %280 : vector<1x1xi1> to vector<1x1xi32>
    %284 = arith.sitofp %283 : vector<1x1xi32> to vector<1x1xf32>
    %cst_88 = arith.constant 1.000000e+00 : f32
    %285 = vector.broadcast %cst_88 : f32 to vector<1x1xf32>
    %286 = arith.subf %285, %282 : vector<1x1xf32>
    %287 = arith.subf %286, %284 : vector<1x1xf32>
    %288 = vector.extract_strided_slice %261 {offsets = [0, 128], sizes = [8, 128], strides = [1, 1]} : vector<8x384xf32> to vector<8x128xf32>
    %289 = arith.negf %288 : vector<8x128xf32>
    %290 = math.exp %289 : vector<8x128xf32>
    %cst_89 = arith.constant 1.000000e+00 : f32
    %291 = vector.broadcast %cst_89 : f32 to vector<8x128xf32>
    %292 = arith.addf %291, %290 : vector<8x128xf32>
    %293 = arith.divf %291, %292 : vector<8x128xf32>
    %294 = vector.extract_strided_slice %261 {offsets = [0, 256], sizes = [8, 128], strides = [1, 1]} : vector<8x384xf32> to vector<8x128xf32>
    %c64_i32_90 = arith.constant 64 : i32
    %295 = tpu.dynamic_rotate %293 by %c64_i32_90 dim 1 : vector<8x128xf32>, i32 -> vector<8x128xf32>
    %296 = math.tanh %294 : vector<8x128xf32>
    %297 = arith.negf %294 : vector<8x128xf32>
    %298 = math.exp %297 : vector<8x128xf32>
    %cst_91 = arith.constant 1.000000e+00 : f32
    %299 = vector.broadcast %cst_91 : f32 to vector<8x128xf32>
    %300 = arith.addf %299, %298 : vector<8x128xf32>
    %301 = arith.divf %299, %300 : vector<8x128xf32>
    %c64_i32_92 = arith.constant 64 : i32
    %302 = tpu.dynamic_rotate %301 by %c64_i32_92 dim 1 : vector<8x128xf32>, i32 -> vector<8x128xf32>
    %303 = arith.mulf %295, %254 : vector<8x128xf32>
    %304 = vector.broadcast %282 : vector<1x1xf32> to vector<8x128xf32>
    %305 = arith.mulf %304, %293 : vector<8x128xf32>
    %306 = arith.addf %303, %305 : vector<8x128xf32>
    %307 = vector.broadcast %284 : vector<1x1xf32> to vector<8x128xf32>
    %308 = arith.mulf %307, %296 : vector<8x128xf32>
    %309 = arith.addf %306, %308 : vector<8x128xf32>
    %310 = arith.mulf %293, %296 : vector<8x128xf32>
    %311 = vector.broadcast %287 : vector<1x1xf32> to vector<8x128xf32>
    %312 = arith.mulf %311, %310 : vector<8x128xf32>
    %313 = arith.addf %309, %312 : vector<8x128xf32>
    %314 = math.tanh %313 : vector<8x128xf32>
    %315 = arith.mulf %302, %314 : vector<8x128xf32>
    %c32_93 = arith.constant 32 : index
    %c0_94 = arith.constant 0 : index
    %316 = vector.load %arg8[%c32_93, %c0_94] : memref<64x128xf32, #tpu.memory_space<vmem>>, vector<8x128xf32>
    tpu.vector_store %arg8[%c32_93, %c0_94], %315 {strides = array<i32>} : memref<64x128xf32, #tpu.memory_space<vmem>>, vector<8x128xf32>,
    %c40 = arith.constant 40 : index
    %c0_95 = arith.constant 0 : index
    %317 = vector.load %arg9[%c40, %c0_95] : memref<64x384xf32, #tpu.memory_space<vmem>>, vector<8x384xf32>
    %318 = arith.truncf %315 : vector<8x128xf32> to vector<8x128xbf16>
    %cst_96 = arith.constant dense<0.000000e+00> : vector<8x384xf32>
    %319 = tpu.matmul %318, %19, %cst_96 {dimension_numbers = #tpu.dot_dimension_numbers<[1], [0], [0], [1], [0, 0, 1, 1], [], []>} : vector<8x128xbf16>, vector<128x384xbf16>, vector<8x384xf32> -> vector<8x384xf32>
    %320 = arith.addf %317, %319 : vector<8x384xf32>
    %321 = vector.extract_strided_slice %320 {offsets = [0, 0], sizes = [8, 2], strides = [1, 1]} : vector<8x384xf32> to vector<8x2xf32>
    %cst_97 = arith.constant 0.000000e+00 : f32
    %322 = vector.broadcast %cst_97 : f32 to vector<8x2xf32>
    %323 = arith.cmpf ogt, %321, %322 : vector<8x2xf32>
    %cst_98 = arith.constant 0.000000e+00 : f32
    %324 = vector.broadcast %cst_98 : f32 to vector<8x2xf32>
    %325 = arith.select %323, %4, %324 : vector<8x2xi1>, vector<8x2xf32>
    %cst_99 = arith.constant dense<0.000000e+00> : vector<2xf32>
    %326 = vector.multi_reduction <add>, %325, %cst_99 [0] : vector<8x2xf32> to vector<2xf32>
    %327 = vector.shape_cast %326 : vector<2xf32> to vector<1x2xf32>
    %328 = vector.extract_strided_slice %327 {offsets = [0, 0], sizes = [1, 1], strides = [1, 1]} : vector<1x2xf32> to vector<1x1xf32>
    %329 = vector.extract_strided_slice %327 {offsets = [0, 1], sizes = [1, 1], strides = [1, 1]} : vector<1x2xf32> to vector<1x1xf32>
    %cst_100 = arith.constant 1.000000e+00 : f32
    %330 = vector.broadcast %cst_100 : f32 to vector<1x1xf32>
    %331 = arith.cmpf olt, %329, %330 : vector<1x1xf32>
    %cst_101 = arith.constant 1.000000e+00 : f32
    %332 = vector.broadcast %cst_101 : f32 to vector<1x1xf32>
    %333 = arith.cmpf ogt, %328, %332 : vector<1x1xf32>
    %334 = arith.andi %331, %333 : vector<1x1xi1>
    %cst_102 = arith.constant 1.000000e+00 : f32
    %335 = vector.broadcast %cst_102 : f32 to vector<1x1xf32>
    %336 = arith.cmpf ogt, %329, %335 : vector<1x1xf32>
    %cst_103 = arith.constant 1.000000e+00 : f32
    %337 = vector.broadcast %cst_103 : f32 to vector<1x1xf32>
    %338 = arith.cmpf olt, %328, %337 : vector<1x1xf32>
    %339 = arith.andi %336, %338 : vector<1x1xi1>
    %340 = arith.extui %334 : vector<1x1xi1> to vector<1x1xi32>
    %341 = arith.sitofp %340 : vector<1x1xi32> to vector<1x1xf32>
    %342 = arith.extui %339 : vector<1x1xi1> to vector<1x1xi32>
    %343 = arith.sitofp %342 : vector<1x1xi32> to vector<1x1xf32>
    %cst_104 = arith.constant 1.000000e+00 : f32
    %344 = vector.broadcast %cst_104 : f32 to vector<1x1xf32>
    %345 = arith.subf %344, %341 : vector<1x1xf32>
    %346 = arith.subf %345, %343 : vector<1x1xf32>
    %347 = vector.extract_strided_slice %320 {offsets = [0, 128], sizes = [8, 128], strides = [1, 1]} : vector<8x384xf32> to vector<8x128xf32>
    %348 = arith.negf %347 : vector<8x128xf32>
    %349 = math.exp %348 : vector<8x128xf32>
    %cst_105 = arith.constant 1.000000e+00 : f32
    %350 = vector.broadcast %cst_105 : f32 to vector<8x128xf32>
    %351 = arith.addf %350, %349 : vector<8x128xf32>
    %352 = arith.divf %350, %351 : vector<8x128xf32>
    %353 = vector.extract_strided_slice %320 {offsets = [0, 256], sizes = [8, 128], strides = [1, 1]} : vector<8x384xf32> to vector<8x128xf32>
    %c64_i32_106 = arith.constant 64 : i32
    %354 = tpu.dynamic_rotate %352 by %c64_i32_106 dim 1 : vector<8x128xf32>, i32 -> vector<8x128xf32>
    %355 = math.tanh %353 : vector<8x128xf32>
    %356 = arith.negf %353 : vector<8x128xf32>
    %357 = math.exp %356 : vector<8x128xf32>
    %cst_107 = arith.constant 1.000000e+00 : f32
    %358 = vector.broadcast %cst_107 : f32 to vector<8x128xf32>
    %359 = arith.addf %358, %357 : vector<8x128xf32>
    %360 = arith.divf %358, %359 : vector<8x128xf32>
    %c64_i32_108 = arith.constant 64 : i32
    %361 = tpu.dynamic_rotate %360 by %c64_i32_108 dim 1 : vector<8x128xf32>, i32 -> vector<8x128xf32>
    %362 = arith.mulf %354, %313 : vector<8x128xf32>
    %363 = vector.broadcast %341 : vector<1x1xf32> to vector<8x128xf32>
    %364 = arith.mulf %363, %352 : vector<8x128xf32>
    %365 = arith.addf %362, %364 : vector<8x128xf32>
    %366 = vector.broadcast %343 : vector<1x1xf32> to vector<8x128xf32>
    %367 = arith.mulf %366, %355 : vector<8x128xf32>
    %368 = arith.addf %365, %367 : vector<8x128xf32>
    %369 = arith.mulf %352, %355 : vector<8x128xf32>
    %370 = vector.broadcast %346 : vector<1x1xf32> to vector<8x128xf32>
    %371 = arith.mulf %370, %369 : vector<8x128xf32>
    %372 = arith.addf %368, %371 : vector<8x128xf32>
    %373 = math.tanh %372 : vector<8x128xf32>
    %374 = arith.mulf %361, %373 : vector<8x128xf32>
    %c40_109 = arith.constant 40 : index
    %c0_110 = arith.constant 0 : index
    %375 = vector.load %arg8[%c40_109, %c0_110] : memref<64x128xf32, #tpu.memory_space<vmem>>, vector<8x128xf32>
    tpu.vector_store %arg8[%c40_109, %c0_110], %374 {strides = array<i32>} : memref<64x128xf32, #tpu.memory_space<vmem>>, vector<8x128xf32>,
    %c48 = arith.constant 48 : index
    %c0_111 = arith.constant 0 : index
    %376 = vector.load %arg9[%c48, %c0_111] : memref<64x384xf32, #tpu.memory_space<vmem>>, vector<8x384xf32>
    %377 = arith.truncf %374 : vector<8x128xf32> to vector<8x128xbf16>
    %cst_112 = arith.constant dense<0.000000e+00> : vector<8x384xf32>
    %378 = tpu.matmul %377, %19, %cst_112 {dimension_numbers = #tpu.dot_dimension_numbers<[1], [0], [0], [1], [0, 0, 1, 1], [], []>} : vector<8x128xbf16>, vector<128x384xbf16>, vector<8x384xf32> -> vector<8x384xf32>
    %379 = arith.addf %376, %378 : vector<8x384xf32>
    %380 = vector.extract_strided_slice %379 {offsets = [0, 0], sizes = [8, 2], strides = [1, 1]} : vector<8x384xf32> to vector<8x2xf32>
    %cst_113 = arith.constant 0.000000e+00 : f32
    %381 = vector.broadcast %cst_113 : f32 to vector<8x2xf32>
    %382 = arith.cmpf ogt, %380, %381 : vector<8x2xf32>
    %cst_114 = arith.constant 0.000000e+00 : f32
    %383 = vector.broadcast %cst_114 : f32 to vector<8x2xf32>
    %384 = arith.select %382, %4, %383 : vector<8x2xi1>, vector<8x2xf32>
    %cst_115 = arith.constant dense<0.000000e+00> : vector<2xf32>
    %385 = vector.multi_reduction <add>, %384, %cst_115 [0] : vector<8x2xf32> to vector<2xf32>
    %386 = vector.shape_cast %385 : vector<2xf32> to vector<1x2xf32>
    %387 = vector.extract_strided_slice %386 {offsets = [0, 0], sizes = [1, 1], strides = [1, 1]} : vector<1x2xf32> to vector<1x1xf32>
    %388 = vector.extract_strided_slice %386 {offsets = [0, 1], sizes = [1, 1], strides = [1, 1]} : vector<1x2xf32> to vector<1x1xf32>
    %cst_116 = arith.constant 1.000000e+00 : f32
    %389 = vector.broadcast %cst_116 : f32 to vector<1x1xf32>
    %390 = arith.cmpf olt, %388, %389 : vector<1x1xf32>
    %cst_117 = arith.constant 1.000000e+00 : f32
    %391 = vector.broadcast %cst_117 : f32 to vector<1x1xf32>
    %392 = arith.cmpf ogt, %387, %391 : vector<1x1xf32>
    %393 = arith.andi %390, %392 : vector<1x1xi1>
    %cst_118 = arith.constant 1.000000e+00 : f32
    %394 = vector.broadcast %cst_118 : f32 to vector<1x1xf32>
    %395 = arith.cmpf ogt, %388, %394 : vector<1x1xf32>
    %cst_119 = arith.constant 1.000000e+00 : f32
    %396 = vector.broadcast %cst_119 : f32 to vector<1x1xf32>
    %397 = arith.cmpf olt, %387, %396 : vector<1x1xf32>
    %398 = arith.andi %395, %397 : vector<1x1xi1>
    %399 = arith.extui %393 : vector<1x1xi1> to vector<1x1xi32>
    %400 = arith.sitofp %399 : vector<1x1xi32> to vector<1x1xf32>
    %401 = arith.extui %398 : vector<1x1xi1> to vector<1x1xi32>
    %402 = arith.sitofp %401 : vector<1x1xi32> to vector<1x1xf32>
    %cst_120 = arith.constant 1.000000e+00 : f32
    %403 = vector.broadcast %cst_120 : f32 to vector<1x1xf32>
    %404 = arith.subf %403, %400 : vector<1x1xf32>
    %405 = arith.subf %404, %402 : vector<1x1xf32>
    %406 = vector.extract_strided_slice %379 {offsets = [0, 128], sizes = [8, 128], strides = [1, 1]} : vector<8x384xf32> to vector<8x128xf32>
    %407 = arith.negf %406 : vector<8x128xf32>
    %408 = math.exp %407 : vector<8x128xf32>
    %cst_121 = arith.constant 1.000000e+00 : f32
    %409 = vector.broadcast %cst_121 : f32 to vector<8x128xf32>
    %410 = arith.addf %409, %408 : vector<8x128xf32>
    %411 = arith.divf %409, %410 : vector<8x128xf32>
    %412 = vector.extract_strided_slice %379 {offsets = [0, 256], sizes = [8, 128], strides = [1, 1]} : vector<8x384xf32> to vector<8x128xf32>
    %c64_i32_122 = arith.constant 64 : i32
    %413 = tpu.dynamic_rotate %411 by %c64_i32_122 dim 1 : vector<8x128xf32>, i32 -> vector<8x128xf32>
    %414 = math.tanh %412 : vector<8x128xf32>
    %415 = arith.negf %412 : vector<8x128xf32>
    %416 = math.exp %415 : vector<8x128xf32>
    %cst_123 = arith.constant 1.000000e+00 : f32
    %417 = vector.broadcast %cst_123 : f32 to vector<8x128xf32>
    %418 = arith.addf %417, %416 : vector<8x128xf32>
    %419 = arith.divf %417, %418 : vector<8x128xf32>
    %c64_i32_124 = arith.constant 64 : i32
    %420 = tpu.dynamic_rotate %419 by %c64_i32_124 dim 1 : vector<8x128xf32>, i32 -> vector<8x128xf32>
    %421 = arith.mulf %413, %372 : vector<8x128xf32>
    %422 = vector.broadcast %400 : vector<1x1xf32> to vector<8x128xf32>
    %423 = arith.mulf %422, %411 : vector<8x128xf32>
    %424 = arith.addf %421, %423 : vector<8x128xf32>
    %425 = vector.broadcast %402 : vector<1x1xf32> to vector<8x128xf32>
    %426 = arith.mulf %425, %414 : vector<8x128xf32>
    %427 = arith.addf %424, %426 : vector<8x128xf32>
    %428 = arith.mulf %411, %414 : vector<8x128xf32>
    %429 = vector.broadcast %405 : vector<1x1xf32> to vector<8x128xf32>
    %430 = arith.mulf %429, %428 : vector<8x128xf32>
    %431 = arith.addf %427, %430 : vector<8x128xf32>
    %432 = math.tanh %431 : vector<8x128xf32>
    %433 = arith.mulf %420, %432 : vector<8x128xf32>
    %c48_125 = arith.constant 48 : index
    %c0_126 = arith.constant 0 : index
    %434 = vector.load %arg8[%c48_125, %c0_126] : memref<64x128xf32, #tpu.memory_space<vmem>>, vector<8x128xf32>
    tpu.vector_store %arg8[%c48_125, %c0_126], %433 {strides = array<i32>} : memref<64x128xf32, #tpu.memory_space<vmem>>, vector<8x128xf32>,
    %c56 = arith.constant 56 : index
    %c0_127 = arith.constant 0 : index
    %435 = vector.load %arg9[%c56, %c0_127] : memref<64x384xf32, #tpu.memory_space<vmem>>, vector<8x384xf32>
    %436 = arith.truncf %433 : vector<8x128xf32> to vector<8x128xbf16>
    %cst_128 = arith.constant dense<0.000000e+00> : vector<8x384xf32>
    %437 = tpu.matmul %436, %19, %cst_128 {dimension_numbers = #tpu.dot_dimension_numbers<[1], [0], [0], [1], [0, 0, 1, 1], [], []>} : vector<8x128xbf16>, vector<128x384xbf16>, vector<8x384xf32> -> vector<8x384xf32>
    %438 = arith.addf %435, %437 : vector<8x384xf32>
    %439 = vector.extract_strided_slice %438 {offsets = [0, 0], sizes = [8, 2], strides = [1, 1]} : vector<8x384xf32> to vector<8x2xf32>
    %cst_129 = arith.constant 0.000000e+00 : f32
    %440 = vector.broadcast %cst_129 : f32 to vector<8x2xf32>
    %441 = arith.cmpf ogt, %439, %440 : vector<8x2xf32>
    %cst_130 = arith.constant 0.000000e+00 : f32
    %442 = vector.broadcast %cst_130 : f32 to vector<8x2xf32>
    %443 = arith.select %441, %4, %442 : vector<8x2xi1>, vector<8x2xf32>
    %cst_131 = arith.constant dense<0.000000e+00> : vector<2xf32>
    %444 = vector.multi_reduction <add>, %443, %cst_131 [0] : vector<8x2xf32> to vector<2xf32>
    %445 = vector.shape_cast %444 : vector<2xf32> to vector<1x2xf32>
    %446 = vector.extract_strided_slice %445 {offsets = [0, 0], sizes = [1, 1], strides = [1, 1]} : vector<1x2xf32> to vector<1x1xf32>
    %447 = vector.extract_strided_slice %445 {offsets = [0, 1], sizes = [1, 1], strides = [1, 1]} : vector<1x2xf32> to vector<1x1xf32>
    %cst_132 = arith.constant 1.000000e+00 : f32
    %448 = vector.broadcast %cst_132 : f32 to vector<1x1xf32>
    %449 = arith.cmpf olt, %447, %448 : vector<1x1xf32>
    %cst_133 = arith.constant 1.000000e+00 : f32
    %450 = vector.broadcast %cst_133 : f32 to vector<1x1xf32>
    %451 = arith.cmpf ogt, %446, %450 : vector<1x1xf32>
    %452 = arith.andi %449, %451 : vector<1x1xi1>
    %cst_134 = arith.constant 1.000000e+00 : f32
    %453 = vector.broadcast %cst_134 : f32 to vector<1x1xf32>
    %454 = arith.cmpf ogt, %447, %453 : vector<1x1xf32>
    %cst_135 = arith.constant 1.000000e+00 : f32
    %455 = vector.broadcast %cst_135 : f32 to vector<1x1xf32>
    %456 = arith.cmpf olt, %446, %455 : vector<1x1xf32>
    %457 = arith.andi %454, %456 : vector<1x1xi1>
    %458 = arith.extui %452 : vector<1x1xi1> to vector<1x1xi32>
    %459 = arith.sitofp %458 : vector<1x1xi32> to vector<1x1xf32>
    %460 = arith.extui %457 : vector<1x1xi1> to vector<1x1xi32>
    %461 = arith.sitofp %460 : vector<1x1xi32> to vector<1x1xf32>
    %cst_136 = arith.constant 1.000000e+00 : f32
    %462 = vector.broadcast %cst_136 : f32 to vector<1x1xf32>
    %463 = arith.subf %462, %459 : vector<1x1xf32>
    %464 = arith.subf %463, %461 : vector<1x1xf32>
    %465 = vector.extract_strided_slice %438 {offsets = [0, 128], sizes = [8, 128], strides = [1, 1]} : vector<8x384xf32> to vector<8x128xf32>
    %466 = arith.negf %465 : vector<8x128xf32>
    %467 = math.exp %466 : vector<8x128xf32>
    %cst_137 = arith.constant 1.000000e+00 : f32
    %468 = vector.broadcast %cst_137 : f32 to vector<8x128xf32>
    %469 = arith.addf %468, %467 : vector<8x128xf32>
    %470 = arith.divf %468, %469 : vector<8x128xf32>
    %471 = vector.extract_strided_slice %438 {offsets = [0, 256], sizes = [8, 128], strides = [1, 1]} : vector<8x384xf32> to vector<8x128xf32>
    %c64_i32_138 = arith.constant 64 : i32
    %472 = tpu.dynamic_rotate %470 by %c64_i32_138 dim 1 : vector<8x128xf32>, i32 -> vector<8x128xf32>
    %473 = math.tanh %471 : vector<8x128xf32>
    %474 = arith.negf %471 : vector<8x128xf32>
    %475 = math.exp %474 : vector<8x128xf32>
    %cst_139 = arith.constant 1.000000e+00 : f32
    %476 = vector.broadcast %cst_139 : f32 to vector<8x128xf32>
    %477 = arith.addf %476, %475 : vector<8x128xf32>
    %478 = arith.divf %476, %477 : vector<8x128xf32>
    %c64_i32_140 = arith.constant 64 : i32
    %479 = tpu.dynamic_rotate %478 by %c64_i32_140 dim 1 : vector<8x128xf32>, i32 -> vector<8x128xf32>
    %480 = arith.mulf %472, %431 : vector<8x128xf32>
    %481 = vector.broadcast %459 : vector<1x1xf32> to vector<8x128xf32>
    %482 = arith.mulf %481, %470 : vector<8x128xf32>
    %483 = arith.addf %480, %482 : vector<8x128xf32>
    %484 = vector.broadcast %461 : vector<1x1xf32> to vector<8x128xf32>
    %485 = arith.mulf %484, %473 : vector<8x128xf32>
    %486 = arith.addf %483, %485 : vector<8x128xf32>
    %487 = arith.mulf %470, %473 : vector<8x128xf32>
    %488 = vector.broadcast %464 : vector<1x1xf32> to vector<8x128xf32>
    %489 = arith.mulf %488, %487 : vector<8x128xf32>
    %490 = arith.addf %486, %489 : vector<8x128xf32>
    %491 = math.tanh %490 : vector<8x128xf32>
    %492 = arith.mulf %479, %491 : vector<8x128xf32>
    %c56_141 = arith.constant 56 : index
    %c0_142 = arith.constant 0 : index
    %493 = vector.load %arg8[%c56_141, %c0_142] : memref<64x128xf32, #tpu.memory_space<vmem>>, vector<8x128xf32>
    tpu.vector_store %arg8[%c56_141, %c0_142], %492 {strides = array<i32>} : memref<64x128xf32, #tpu.memory_space<vmem>>, vector<8x128xf32>,
    %c2_i32_143 = arith.constant 2 : i32
    %494 = arith.cmpi eq, %arg0, %c2_i32_143 : i32
    %495 = arith.extui %494 : i1 to i32
    %c0_i32_144 = arith.constant 0 : i32
    %496 = arith.cmpi ne, %495, %c0_i32_144 : i32
    scf.if %496 {
      %497 = arith.truncf %492 : vector<8x128xf32> to vector<8x128xbf16>
      %c0_145 = arith.constant 0 : index
      %c0_146 = arith.constant 0 : index
      %498 = vector.load %arg5[%c0_145, %c0_146] : memref<128x128xbf16, #tpu.memory_space<vmem>>, vector<128x128xbf16>
      %cst_147 = arith.constant dense<0.000000e+00> : vector<8x128xf32>
      %499 = tpu.matmul %497, %498, %cst_147 {dimension_numbers = #tpu.dot_dimension_numbers<[1], [0], [0], [1], [0, 0, 1, 1], [], []>} : vector<8x128xbf16>, vector<128x128xbf16>, vector<8x128xf32> -> vector<8x128xf32>
      %c0_148 = arith.constant 0 : index
      %c0_149 = arith.constant 0 : index
      %500 = vector.load %arg6[%c0_148, %c0_149] : memref<1x128xf32, #tpu.memory_space<vmem>>, vector<1x128xf32>
      %501 = vector.broadcast %500 : vector<1x128xf32> to vector<8x128xf32>
      %502 = arith.addf %499, %501 : vector<8x128xf32>
      %c0_150 = arith.constant 0 : index
      %c0_151 = arith.constant 0 : index
      %503 = vector.load %arg7[%c0_150, %c0_151] : memref<8x128xf32, #tpu.memory_space<vmem>>, vector<8x128xf32>
      tpu.vector_store %arg7[%c0_150, %c0_151], %502 {strides = array<i32>} : memref<8x128xf32, #tpu.memory_space<vmem>>, vector<8x128xf32>,
    } else {
    }
    return
  }
  func.func @transform_0(%arg0: i32) -> (i32, i32) {
    %c0_i32 = arith.constant 0 : i32
    %c0_i32_0 = arith.constant 0 : i32
    %c0_i32_1 = arith.constant 0 : i32
    return %c0_i32, %c0_i32_0 : i32, i32
  }
  func.func @transform_1(%arg0: i32) -> (i32, i32, i32) {
    %c0_i32 = arith.constant 0 : i32
    %c0_i32_0 = arith.constant 0 : i32
    %c0_i32_1 = arith.constant 0 : i32
    return %arg0, %c0_i32, %c0_i32_0 : i32, i32, i32
  }
  func.func @transform_2(%arg0: i32) -> (i32, i32, i32) {
    %c0_i32 = arith.constant 0 : i32
    %c0_i32_0 = arith.constant 0 : i32
    %c0_i32_1 = arith.constant 0 : i32
    return %arg0, %c0_i32, %c0_i32_0 : i32, i32, i32
  }
  func.func @transform_3(%arg0: i32) -> (i32, i32, i32) {
    %c0_i32 = arith.constant 0 : i32
    %c0_i32_0 = arith.constant 0 : i32
    %c0_i32_1 = arith.constant 0 : i32
    return %arg0, %c0_i32, %c0_i32_0 : i32, i32, i32
  }
  func.func @transform_4(%arg0: i32) -> (i32, i32) {
    %c0_i32 = arith.constant 0 : i32
    %c0_i32_0 = arith.constant 0 : i32
    %c0_i32_1 = arith.constant 0 : i32
    return %c0_i32, %c0_i32_0 : i32, i32
  }
  func.func @transform_5(%arg0: i32) -> (i32, i32) {
    %c0_i32 = arith.constant 0 : i32
    %c0_i32_0 = arith.constant 0 : i32
    %c0_i32_1 = arith.constant 0 : i32
    return %c0_i32, %c0_i32_0 : i32, i32
  }
  func.func @transform_6(%arg0: i32) -> (i32, i32) {
    %c0_i32 = arith.constant 0 : i32
    %c0_i32_0 = arith.constant 0 : i32
    %c0_i32_1 = arith.constant 0 : i32
    return %c0_i32, %c0_i32_0 : i32, i32
  }
}

</mosaic_0001>

<llo_original>
// kernel: tpu_custom_call.1
$region0: #{tpu_custom_call.1}
  #allocation0 [shape = 'u32[]', space=smem, size = 0x4, offset = 0x4, fixed_abs, tag = 'smem constant byte address 0x4 - core index']
  #allocation1 [shape = 'u32[72,128]{1,0:T(1,128)}', space=vmem, size = 0x9000, scoped, tag = 'internal scratch']
  #allocation2 [shape = 'f32[64,128]{1,0:T(8,128)}', space=vmem, size = 0x8000, scoped, tag = 'scratch operand']
  #allocation3 [shape = 'f32[64,384]{1,0:T(8,128)}', space=vmem, size = 0x18000, scoped, tag = 'scratch operand']
  %s0 = inlined_call_operand.hbm [shape: f32[64,128], index: 0, kind: input, shape index: {}]
  %s1 = inlined_call_operand.hbm [shape: bf16[3,128,384], index: 1, kind: input, shape index: {}]
  %s2 = inlined_call_operand.hbm [shape: bf16[3,128,384], index: 2, kind: input, shape index: {}]
  %s3 = inlined_call_operand.hbm [shape: f32[3,1,384], index: 3, kind: input, shape index: {}]
  %s4 = inlined_call_operand.hbm [shape: bf16[128,128], index: 4, kind: input, shape index: {}]
  %s5 = inlined_call_operand.vmem [shape: f32[1,128], index: 5, kind: input, shape index: {}]
  %s6 = inlined_call_operand.hbm [shape: f32[8,128], index: 6, kind: output, shape index: {}]
  %s7 = sld [smem:[#allocation0]]
  $region85: #{tpu_custom_call.1} parent=0
    _
  %s9 = ssub.s32 1, %s7
  %s10 = scalar_select 0, %s9, %s7
  $region1: #{tpu_custom_call.1} parent=0
    #allocation4 [shape = 'u8[32768]{0}', space=vmem, size = 0x8000, scoped, tag = 'input window, operand 0, single buffered']
    #allocation5 [shape = 's32[2]{0}', space=sflag, size = 0x8, scoped, tag = 'scoped memory for tpu_custom_call.1']
    #allocation6 [shape = 's32[2]{0}', space=sflag, size = 0x8, scoped, tag = 'scoped memory for tpu_custom_call.1']
    #allocation7 [shape = 'u8[196608]{0}', space=vmem, size = 0x30000, scoped, tag = 'input window, operand 1']
    #allocation8 [shape = 's32[2]{0}', space=sflag, size = 0x8, scoped, tag = 'scoped memory for tpu_custom_call.1']
    #allocation9 [shape = 'u8[196608]{0}', space=vmem, size = 0x30000, scoped, tag = 'input window, operand 2']
    #allocation10 [shape = 'u8[3072]{0}', space=vmem, size = 0xc00, scoped, tag = 'input window, operand 3']
    #allocation11 [shape = 's32[2]{0}', space=sflag, size = 0x8, scoped, tag = 'scoped memory for tpu_custom_call.1']
    #allocation12 [shape = 'u8[32768]{0}', space=vmem, size = 0x8000, scoped, tag = 'input window, operand 4, single buffered']
    #allocation13 [shape = 'u8[4096]{0}', space=vmem, size = 0x1000, scoped, tag = 'output window, operand 0, single buffered']
    %11 = vsyncpa [#allocation5], 0
    %12 = vsyncpa [#allocation8], 0
    %s13 = scalar_lea.sflag [#allocation8], 1
    %14 = vsyncpa %s13, 0
    %15 = vsyncpa [#allocation11], 0
    %s16 = scalar_lea.sflag [#allocation11], 1
    %17 = vsyncpa %s16, 0
    %18 = vsyncpa [#allocation6], 0
    loop: start=0, step=1, limit=5
    $region2: #{tpu_custom_call.1} parent=1 // loop_pre_header
      _
    $region3: #{tpu_custom_call.1} parent=1 // loop_header
      %s20 = sphi 0, %s24
      %p21 = scmp.ge.s32.totalorder %s20, 5
      %s28 = sphi 0, %s28
      %s30 = sphi 0, %s28
      %s31 = sphi 0, %s30
      %s45 = sphi 0, %s31
      %s51 = sphi 0, %s53
      %s54 = sphi 0, %s51
      %s55 = sphi 0, %s54
      %s71 = sphi 0, %s55
      %s77 = sphi 0, %s79
      %s80 = sphi 0, %s77
      %s81 = sphi 0, %s80
      %s97 = sphi 0, %s81
      %s103 = sphi 0, %s105
      %s106 = sphi 0, %s103
      %s107 = sphi 0, %s106
      %s123 = sphi 0, %s107
      %s127 = sphi 0, %s127
      %s129 = sphi 0, %s127
      %s130 = sphi 0, %s129
      %s144 = sphi 0, %s130
      %s148 = sphi 0, %s148
      %s150 = sphi 0, %s148
      %s151 = sphi 0, %s150
      %s165 = sphi 0, %s151
      %s169 = sphi 0, %s169
      %s171 = sphi 0, %s169
      %s172 = sphi 0, %s171
      %s186 = sphi 0, %s172
    $region4: #{tpu_custom_call.1} parent=1 // loop_header_branch
      %23 = sbr.rel (%p21) target = $region8
    $region5: #{tpu_custom_call.1} parent=1 // loop_body
      %s25 = ssub.s32 %s20, 1
      %s26 = ssub.s32 %s20, 2
      %s27 = sadd.s32 %s20, 1
      %s29 = sadd.s32 %s28, 1
      %p32 = scmp.eq.s32.totalorder %s20, 2
      %p33 = scmp.ne.s32.totalorder %s28, %s30
      %p34 = scmp.eq.s32.totalorder %s20, 0
      %p35 = por %p33, %p34
      %p36 = scmp.ne.s32.totalorder %s28, %s30
      %p37 = scmp.eq.s32.totalorder %s25, 2
      %p38 = por %p36, %p37
      %p39 = scmp.ne.s32.totalorder %s30, %s31
      %p40 = scmp.eq.s32.totalorder %s25, 0
      %p41 = por %p39, %p40
      %p42 = scmp.ne.s32.totalorder %s30, %s31
      %p43 = scmp.eq.s32.totalorder %s26, 2
      %p44 = por %p42, %p43
      %p46 = scmp.ne.s32.totalorder %s31, %s45
      %p47 = scmp.eq.s32.totalorder %s26, 0
      %p48 = por %p46, %p47
      %s49 = ssub.s32 %s20, %s27
      %p50 = scmp.eq.s32.totalorder %s49, 0
      %s52 = sadd.s32 %s51, 1
      %s53 = scalar_select %p50, %s51, %s52
      %p56 = pneg %p50
      %p57 = scmp.eq.s32.totalorder %s20, 2
      %p58 = por %p56, %p57
      %p59 = scmp.ne.s32.totalorder %s51, %s54
      %p60 = scmp.eq.s32.totalorder %s20, 0
      %p61 = por %p59, %p60
      %p62 = scmp.ne.s32.totalorder %s51, %s54
      %p63 = scmp.eq.s32.totalorder %s25, 2
      %p64 = por %p62, %p63
      %p65 = scmp.ne.s32.totalorder %s54, %s55
      %p66 = scmp.eq.s32.totalorder %s25, 0
      %p67 = por %p65, %p66
      %p68 = scmp.ne.s32.totalorder %s54, %s55
      %p69 = scmp.eq.s32.totalorder %s26, 2
      %p70 = por %p68, %p69
      %p72 = scmp.ne.s32.totalorder %s55, %s71
      %p73 = scmp.eq.s32.totalorder %s26, 0
      %p74 = por %p72, %p73
      %s75 = ssub.s32 %s20, %s27
      %p76 = scmp.eq.s32.totalorder %s75, 0
      %s78 = sadd.s32 %s77, 1
      %s79 = scalar_select %p76, %s77, %s78
      %p82 = pneg %p76
      %p83 = scmp.eq.s32.totalorder %s20, 2
      %p84 = por %p82, %p83
      %p85 = scmp.ne.s32.totalorder %s77, %s80
      %p86 = scmp.eq.s32.totalorder %s20, 0
      %p87 = por %p85, %p86
      %p88 = scmp.ne.s32.totalorder %s77, %s80
      %p89 = scmp.eq.s32.totalorder %s25, 2
      %p90 = por %p88, %p89
      %p91 = scmp.ne.s32.totalorder %s80, %s81
      %p92 = scmp.eq.s32.totalorder %s25, 0
      %p93 = por %p91, %p92
      %p94 = scmp.ne.s32.totalorder %s80, %s81
      %p95 = scmp.eq.s32.totalorder %s26, 2
      %p96 = por %p94, %p95
      %p98 = scmp.ne.s32.totalorder %s81, %s97
      %p99 = scmp.eq.s32.totalorder %s26, 0
      %p100 = por %p98, %p99
      %s101 = ssub.s32 %s20, %s27
      %p102 = scmp.eq.s32.totalorder %s101, 0
      %s104 = sadd.s32 %s103, 1
      %s105 = scalar_select %p102, %s103, %s104
      %p108 = pneg %p102
      %p109 = scmp.eq.s32.totalorder %s20, 2
      %p110 = por %p108, %p109
      %p111 = scmp.ne.s32.totalorder %s103, %s106
      %p112 = scmp.eq.s32.totalorder %s20, 0
      %p113 = por %p111, %p112
      %p114 = scmp.ne.s32.totalorder %s103, %s106
      %p115 = scmp.eq.s32.totalorder %s25, 2
      %p116 = por %p114, %p115
      %p117 = scmp.ne.s32.totalorder %s106, %s107
      %p118 = scmp.eq.s32.totalorder %s25, 0
      %p119 = por %p117, %p118
      %p120 = scmp.ne.s32.totalorder %s106, %s107
      %p121 = scmp.eq.s32.totalorder %s26, 2
      %p122 = por %p120, %p121
      %p124 = scmp.ne.s32.totalorder %s107, %s123
      %p125 = scmp.eq.s32.totalorder %s26, 0
      %p126 = por %p124, %p125
      %s128 = sadd.s32 %s127, 1
      %p131 = scmp.eq.s32.totalorder %s20, 2
      %p132 = scmp.ne.s32.totalorder %s127, %s129
      %p133 = scmp.eq.s32.totalorder %s20, 0
      %p134 = por %p132, %p133
      %p135 = scmp.ne.s32.totalorder %s127, %s129
      %p136 = scmp.eq.s32.totalorder %s25, 2
      %p137 = por %p135, %p136
      %p138 = scmp.ne.s32.totalorder %s129, %s130
      %p139 = scmp.eq.s32.totalorder %s25, 0
      %p140 = por %p138, %p139
      %p141 = scmp.ne.s32.totalorder %s129, %s130
      %p142 = scmp.eq.s32.totalorder %s26, 2
      %p143 = por %p141, %p142
      %p145 = scmp.ne.s32.totalorder %s130, %s144
      %p146 = scmp.eq.s32.totalorder %s26, 0
      %p147 = por %p145, %p146
      %s149 = sadd.s32 %s148, 1
      %p152 = scmp.eq.s32.totalorder %s20, 2
      %p153 = scmp.ne.s32.totalorder %s148, %s150
      %p154 = scmp.eq.s32.totalorder %s20, 0
      %p155 = por %p153, %p154
      %p156 = scmp.ne.s32.totalorder %s148, %s150
      %p157 = scmp.eq.s32.totalorder %s25, 2
      %p158 = por %p156, %p157
      %p159 = scmp.ne.s32.totalorder %s150, %s151
      %p160 = scmp.eq.s32.totalorder %s25, 0
      %p161 = por %p159, %p160
      %p162 = scmp.ne.s32.totalorder %s150, %s151
      %p163 = scmp.eq.s32.totalorder %s26, 2
      %p164 = por %p162, %p163
      %p166 = scmp.ne.s32.totalorder %s151, %s165
      %p167 = scmp.eq.s32.totalorder %s26, 0
      %p168 = por %p166, %p167
      %s170 = sadd.s32 %s169, 1
      %p173 = scmp.eq.s32.totalorder %s20, 2
      %p174 = scmp.ne.s32.totalorder %s169, %s171
      %p175 = scmp.eq.s32.totalorder %s20, 0
      %p176 = por %p174, %p175
      %p177 = scmp.ne.s32.totalorder %s169, %s171
      %p178 = scmp.eq.s32.totalorder %s25, 2
      %p179 = por %p177, %p178
      %p180 = scmp.ne.s32.totalorder %s171, %s172
      %p181 = scmp.eq.s32.totalorder %s25, 0
      %p182 = por %p180, %p181
      %p183 = scmp.ne.s32.totalorder %s171, %s172
      %p184 = scmp.eq.s32.totalorder %s26, 2
      %p185 = por %p183, %p184
      %p187 = scmp.ne.s32.totalorder %s172, %s186
      %p188 = scmp.eq.s32.totalorder %s26, 0
      %p189 = por %p187, %p188
      %p190 = scmp.le.s32.totalorder 1, %s20
      %p191 = scmp.lt.s32.totalorder %s20, 4
      %p192 = pnand %p190, %p191
      %p193 = pneg %p192
      // Predicated region
      $region9: #{tpu_custom_call.1} parent=5 // pred_check
        _
      $region10: #{tpu_custom_call.1} parent=5 // pred_check_branch
        %195 = sbr.rel (%p192) target = $region12
      $region11: #{tpu_custom_call.1} parent=5 // pred_region
        %s196 = ssub.s32 %s20, 1
        // Predicated region
        $region13: #{tpu_custom_call.1} parent=11 // pred_check
          %p197 = pneg %p41
        $region14: #{tpu_custom_call.1} parent=11 // pred_check_branch
          %199 = sbr.rel (%p197) target = $region16
        $region15: #{tpu_custom_call.1} parent=11 // pred_region
          %201 = vsyncadd [#allocation5], 0
          %s202 = sshll.u32 %s0, 4
          %s203 = int_to_ptr.hbm [resolvable:$true] %s202
          %s204 = sshll.u32 [#allocation4], 4
          %s205 = int_to_ptr.vmem [resolvable:$true] %s204
          %210 = dma.hbm_to_vmem [thread:$0]  %s203, 1024, %s205, [#allocation5], 128, 128, 8
        $region16: #{tpu_custom_call.1} parent=11 // pred_fallthru
          _
        // Predicated region
        $region17: #{tpu_custom_call.1} parent=11 // pred_check
          %p211 = pneg %p140
        $region18: #{tpu_custom_call.1} parent=11 // pred_check_branch
          %213 = sbr.rel (%p211) target = $region20
        $region19: #{tpu_custom_call.1} parent=11 // pred_region
          %215 = vsyncadd [#allocation11], 0
          %s216 = sshll.u32 %s4, 4
          %s217 = int_to_ptr.hbm [resolvable:$true] %s216
          %s218 = sshll.u32 [#allocation12], 4
          %s219 = int_to_ptr.vmem [resolvable:$true] %s218
          %224 = dma.hbm_to_vmem [thread:$0]  %s217, 1024, %s219, [#allocation11], 64, 64, 4
        $region20: #{tpu_custom_call.1} parent=11 // pred_fallthru
          _
        // Predicated region
        $region21: #{tpu_custom_call.1} parent=11 // pred_check
          %p225 = pneg %p161
        $region22: #{tpu_custom_call.1} parent=11 // pred_check_branch
          %227 = sbr.rel (%p225) target = $region24
        $region23: #{tpu_custom_call.1} parent=11 // pred_region
          _
        $region24: #{tpu_custom_call.1} parent=11 // pred_fallthru
          _
      $region12: #{tpu_custom_call.1} parent=5 // pred_fallthru
        _
      %p228 = scmp.lt.s32.totalorder %s20, 3
      // Predicated region
      $region25: #{tpu_custom_call.1} parent=5 // pred_check
        %p229 = pneg %p228
      $region26: #{tpu_custom_call.1} parent=5 // pred_check_branch
        %231 = sbr.rel (%p229) target = $region28
      $region27: #{tpu_custom_call.1} parent=5 // pred_region
        // Predicated region
        $region29: #{tpu_custom_call.1} parent=27 // pred_check
          %p232 = pneg %p61
        $region30: #{tpu_custom_call.1} parent=27 // pred_check_branch
          %234 = sbr.rel (%p232) target = $region32
        $region31: #{tpu_custom_call.1} parent=27 // pred_region
          %s235 = sand.u32 %s20, 1
          %s236 = scalar_lea.sflag [#allocation8], %s235
          %s237 = sand.u32 %s51, 1
          %s238 = smul.addr %s237, 192
          %s239 = scalar_lea.vmem [#allocation7], %s238
          %241 = vsyncadd %s236, 0
          %s242 = smul.addr %s20, 48
          %s243 = smul.addr %s242, 4
          %s244 = scalar_lea.hbm %s1, %s243
          %s245 = sshll.u32 %s244, 4
          %s246 = int_to_ptr.hbm [resolvable:$true] %s245
          %s247 = sshll.u32 %s239, 4
          %s248 = int_to_ptr.vmem [resolvable:$true] %s247
          %253 = dma.hbm_to_vmem [thread:$0]  %s246, 3072, %s248, %s236, 192, 192, 12
        $region32: #{tpu_custom_call.1} parent=27 // pred_fallthru
          _
        // Predicated region
        $region33: #{tpu_custom_call.1} parent=27 // pred_check
          %p254 = pneg %p87
        $region34: #{tpu_custom_call.1} parent=27 // pred_check_branch
          %256 = sbr.rel (%p254) target = $region36
        $region35: #{tpu_custom_call.1} parent=27 // pred_region
          %s257 = sand.u32 %s20, 1
          %s258 = scalar_lea.sflag [#allocation8], %s257
          %s259 = sand.u32 %s77, 1
          %s260 = smul.addr %s259, 192
          %s261 = scalar_lea.vmem [#allocation9], %s260
          %263 = vsyncadd %s258, 0
          %s264 = smul.addr %s20, 48
          %s265 = smul.addr %s264, 4
          %s266 = scalar_lea.hbm %s2, %s265
          %s267 = sshll.u32 %s266, 4
          %s268 = int_to_ptr.hbm [resolvable:$true] %s267
          %s269 = sshll.u32 %s261, 4
          %s270 = int_to_ptr.vmem [resolvable:$true] %s269
          %275 = dma.hbm_to_vmem [thread:$0]  %s268, 3072, %s270, %s258, 192, 192, 12
        $region36: #{tpu_custom_call.1} parent=27 // pred_fallthru
          _
        // Predicated region
        $region37: #{tpu_custom_call.1} parent=27 // pred_check
          %p276 = pneg %p113
        $region38: #{tpu_custom_call.1} parent=27 // pred_check_branch
          %278 = sbr.rel (%p276) target = $region40
        $region39: #{tpu_custom_call.1} parent=27 // pred_region
          %s279 = sand.u32 %s20, 1
          %s280 = scalar_lea.sflag [#allocation11], %s279
          %s281 = sand.u32 %s103, 1
          %s282 = smul.addr %s281, 3
          %s283 = scalar_lea.vmem [#allocation10], %s282
          %285 = vsyncadd %s280, 0
          %s286 = smul.addr %s20, 3
          %s287 = scalar_lea.hbm %s3, %s286
          %s289 = sshll.u32 %s287, 4
          %s290 = int_to_ptr.hbm [resolvable:$true] %s289
          %s291 = sshll.u32 %s283, 4
          %s292 = int_to_ptr.vmem [resolvable:$true] %s291
          %294 = dma.hbm_to_vmem [thread:$0]  %s290, 48, %s292, %s280
        $region40: #{tpu_custom_call.1} parent=27 // pred_fallthru
          _
      $region28: #{tpu_custom_call.1} parent=5 // pred_fallthru
        _
      %p295 = scmp.le.s32.totalorder 1, %s20
      %p296 = scmp.lt.s32.totalorder %s20, 4
      %p297 = pnand %p295, %p296
      %p298 = pneg %p297
      // Predicated region
      $region41: #{tpu_custom_call.1} parent=5 // pred_check
        _
      $region42: #{tpu_custom_call.1} parent=5 // pred_check_branch
        %300 = sbr.rel (%p297) target = $region44
      $region43: #{tpu_custom_call.1} parent=5 // pred_region
        %s301 = ssub.s32 %s20, 1
        // Predicated region
        $region45: #{tpu_custom_call.1} parent=43 // pred_check
          %p302 = pneg %p41
        $region46: #{tpu_custom_call.1} parent=43 // pred_check_branch
          %304 = sbr.rel (%p302) target = $region48
        $region47: #{tpu_custom_call.1} parent=43 // pred_region
          %306 = dma.done [#allocation5], 1024
        $region48: #{tpu_custom_call.1} parent=43 // pred_fallthru
          _
        %s307 = sand.u32 %s25, 1
        %s308 = scalar_lea.sflag [#allocation8], %s307
        %s309 = sand.u32 %s54, 1
        %s310 = smul.addr %s309, 192
        %s311 = scalar_lea.vmem [#allocation7], %s310
        // Predicated region
        $region49: #{tpu_custom_call.1} parent=43 // pred_check
          %p312 = pneg %p67
        $region50: #{tpu_custom_call.1} parent=43 // pred_check_branch
          %314 = sbr.rel (%p312) target = $region52
        $region51: #{tpu_custom_call.1} parent=43 // pred_region
          %316 = dma.done %s308, 3072
        $region52: #{tpu_custom_call.1} parent=43 // pred_fallthru
          _
        %s317 = sand.u32 %s25, 1
        %s318 = scalar_lea.sflag [#allocation8], %s317
        %s319 = sand.u32 %s80, 1
        %s320 = smul.addr %s319, 192
        %s321 = scalar_lea.vmem [#allocation9], %s320
        // Predicated region
        $region53: #{tpu_custom_call.1} parent=43 // pred_check
          %p322 = pneg %p93
        $region54: #{tpu_custom_call.1} parent=43 // pred_check_branch
          %324 = sbr.rel (%p322) target = $region56
        $region55: #{tpu_custom_call.1} parent=43 // pred_region
          %326 = dma.done %s318, 3072
        $region56: #{tpu_custom_call.1} parent=43 // pred_fallthru
          _
        %s327 = sand.u32 %s25, 1
        %s328 = scalar_lea.sflag [#allocation11], %s327
        %s329 = sand.u32 %s106, 1
        %s330 = smul.addr %s329, 3
        %s331 = scalar_lea.vmem [#allocation10], %s330
        // Predicated region
        $region57: #{tpu_custom_call.1} parent=43 // pred_check
          %p332 = pneg %p119
        $region58: #{tpu_custom_call.1} parent=43 // pred_check_branch
          %334 = sbr.rel (%p332) target = $region60
        $region59: #{tpu_custom_call.1} parent=43 // pred_region
          %336 = dma.done %s328, 48
        $region60: #{tpu_custom_call.1} parent=43 // pred_fallthru
          _
        // Predicated region
        $region61: #{tpu_custom_call.1} parent=43 // pred_check
          %p337 = pneg %p140
        $region62: #{tpu_custom_call.1} parent=43 // pred_check_branch
          %339 = sbr.rel (%p337) target = $region64
        $region63: #{tpu_custom_call.1} parent=43 // pred_region
          %341 = dma.done [#allocation11], 1024
        $region64: #{tpu_custom_call.1} parent=43 // pred_fallthru
          _
        %p342 = pneg %p41
        %p343 = pneg %p38
        %s344 = sand.u32 %s25, 1
        %s345 = scalar_lea.sflag [#allocation8], %s344
        %s346 = sand.u32 %s54, 1
        %s347 = smul.addr %s346, 192
        %s348 = scalar_lea.vmem [#allocation7], %s347
        %p349 = pneg %p67
        %p350 = pneg %p64
        %s351 = sand.u32 %s25, 1
        %s352 = scalar_lea.sflag [#allocation8], %s351
        %s353 = sand.u32 %s80, 1
        %s354 = smul.addr %s353, 192
        %s355 = scalar_lea.vmem [#allocation9], %s354
        %p356 = pneg %p93
        %p357 = pneg %p90
        %s358 = sand.u32 %s25, 1
        %s359 = scalar_lea.sflag [#allocation11], %s358
        %s360 = sand.u32 %s106, 1
        %s361 = smul.addr %s360, 3
        %s362 = scalar_lea.vmem [#allocation10], %s361
        %p363 = pneg %p119
        %p364 = pneg %p116
        %p365 = pneg %p140
        %p366 = pneg %p137
        %p367 = pneg %p161
        %p368 = pneg %p158
        %p369 = pneg %p182
        %p370 = pneg %p179
        %v372 = vlaneseq
        %v373 = vshrl.u32 %v372, 7
        %vm374 = vcmp.lt.s32.totalorder %v373, 2
        %v375 = vsel %vm374, 1, 0
        %v376 = vcvt.s32.f32 %v375
        %p377 = scmp.eq.s32.totalorder %s25, 0
        // Predicated region
        $region65: #{tpu_custom_call.1} parent=43 // pred_check
          %p378 = pneg %p377
        $region66: #{tpu_custom_call.1} parent=43 // pred_check_branch
          %380 = sbr.rel (%p378) target = $region68
        $region67: #{tpu_custom_call.1} parent=43 // pred_region
          %v381 = vld [vmem:[#allocation4] sm:$0xff]
          %v382 = vld [vmem:[#allocation4 + $0x8] sm:$0xff]
          %v383 = vld [vmem:[#allocation4 + $0x10] sm:$0xff]
          %v384 = vld [vmem:[#allocation4 + $0x18] sm:$0xff]
          %v385 = vld [vmem:[#allocation4 + $0x20] sm:$0xff]
          %v386 = vld [vmem:[#allocation4 + $0x28] sm:$0xff]
          %v387 = vld [vmem:[#allocation4 + $0x30] sm:$0xff]
          %v388 = vld [vmem:[#allocation4 + $0x38] sm:$0xff]
          %389 = vst [vmem:[#allocation2] sm:$0xff] %v381
          %390 = vst [vmem:[#allocation2 + $0x8] sm:$0xff] %v382
          %391 = vst [vmem:[#allocation2 + $0x10] sm:$0xff] %v383
          %392 = vst [vmem:[#allocation2 + $0x18] sm:$0xff] %v384
          %393 = vst [vmem:[#allocation2 + $0x20] sm:$0xff] %v385
          %394 = vst [vmem:[#allocation2 + $0x28] sm:$0xff] %v386
          %395 = vst [vmem:[#allocation2 + $0x30] sm:$0xff] %v387
          %396 = vst [vmem:[#allocation2 + $0x38] sm:$0xff] %v388
        $region68: #{tpu_custom_call.1} parent=43 // pred_fallthru
          _
        %v397 = vld [vmem:[#allocation2] sm:$0xff]
        %v398 = vld [vmem:[#allocation2 + $0x8] sm:$0xff]
        %v399 = vld [vmem:[#allocation2 + $0x10] sm:$0xff]
        %v400 = vld [vmem:[#allocation2 + $0x18] sm:$0xff]
        %v401 = vld [vmem:[#allocation2 + $0x20] sm:$0xff]
        %v402 = vld [vmem:[#allocation2 + $0x28] sm:$0xff]
        %v403 = vld [vmem:[#allocation2 + $0x30] sm:$0xff]
        %v404 = vld [vmem:[#allocation2 + $0x38] sm:$0xff]
        %v405 = vpack.c.bf16 %v398, %v397
        %v406 = vpack.c.bf16 %v400, %v399
        %v407 = vpack.c.bf16 %v402, %v401
        %v408 = vpack.c.bf16 %v404, %v403
        %v409 = vld [vmem:[%s311] sm:$0xff]
        %v410 = vld [vmem:[%s311 + $0x8] sm:$0xf]
        %v411 = vld [vmem:[%s311 + $0xc] sm:$0xff]
        %v412 = vld [vmem:[%s311 + $0x14] sm:$0xf]
        %v413 = vld [vmem:[%s311 + $0x18] sm:$0xff]
        %v414 = vld [vmem:[%s311 + $0x20] sm:$0xf]
        %v415 = vld [vmem:[%s311 + $0x24] sm:$0xff]
        %v416 = vld [vmem:[%s311 + $0x2c] sm:$0xf]
        %v417 = vld [vmem:[%s311 + $0x30] sm:$0xff]
        %v418 = vld [vmem:[%s311 + $0x38] sm:$0xf]
        %v419 = vld [vmem:[%s311 + $0x3c] sm:$0xff]
        %v420 = vld [vmem:[%s311 + $0x44] sm:$0xf]
        %v421 = vld [vmem:[%s311 + $0x48] sm:$0xff]
        %v422 = vld [vmem:[%s311 + $0x50] sm:$0xf]
        %v423 = vld [vmem:[%s311 + $0x54] sm:$0xff]
        %v424 = vld [vmem:[%s311 + $0x5c] sm:$0xf]
        %v425 = vld [vmem:[%s311 + $0x60] sm:$0xff]
        %v426 = vld [vmem:[%s311 + $0x68] sm:$0xf]
        %v427 = vld [vmem:[%s311 + $0x6c] sm:$0xff]
        %v428 = vld [vmem:[%s311 + $0x74] sm:$0xf]
        %v429 = vld [vmem:[%s311 + $0x78] sm:$0xff]
        %v430 = vld [vmem:[%s311 + $0x80] sm:$0xf]
        %v431 = vld [vmem:[%s311 + $0x84] sm:$0xff]
        %v432 = vld [vmem:[%s311 + $0x8c] sm:$0xf]
        %v433 = vld [vmem:[%s311 + $0x90] sm:$0xff]
        %v434 = vld [vmem:[%s311 + $0x98] sm:$0xf]
        %v435 = vld [vmem:[%s311 + $0x9c] sm:$0xff]
        %v436 = vld [vmem:[%s311 + $0xa4] sm:$0xf]
        %v437 = vld [vmem:[%s311 + $0xa8] sm:$0xff]
        %v438 = vld [vmem:[%s311 + $0xb0] sm:$0xf]
        %v439 = vld [vmem:[%s311 + $0xb4] sm:$0xff]
        %v440 = vld [vmem:[%s311 + $0xbc] sm:$0xf]
        %v441 = vld [vmem:[%s331] sm:$0x7]
        %v443 = vperm.slane %v441, 0
        %v444 = vperm.slane %v441, 1
        %v445 = vperm.slane %v441, 2
        %v481 = vunpack.c.l.b16 %v409
        %v482 = vunpack.c.h.b16 %v409
        %v483 = vunpack.c.l.b16 %v410
        %v484 = vunpack.c.l.b16 %v411
        %v485 = vunpack.c.h.b16 %v411
        %v486 = vunpack.c.l.b16 %v412
        %v487 = vunpack.c.l.b16 %v413
        %v488 = vunpack.c.h.b16 %v413
        %v489 = vunpack.c.l.b16 %v414
        %v490 = vunpack.c.l.b16 %v415
        %v491 = vunpack.c.h.b16 %v415
        %v492 = vunpack.c.l.b16 %v416
        %v493 = vunpack.c.l.b16 %v417
        %v494 = vunpack.c.h.b16 %v417
        %v495 = vunpack.c.l.b16 %v418
        %v496 = vunpack.c.l.b16 %v419
        %v497 = vunpack.c.h.b16 %v419
        %v498 = vunpack.c.l.b16 %v420
        %v499 = vunpack.c.l.b16 %v421
        %v500 = vunpack.c.h.b16 %v421
        %v501 = vunpack.c.l.b16 %v422
        %v502 = vunpack.c.l.b16 %v423
        %v503 = vunpack.c.h.b16 %v423
        %v504 = vunpack.c.l.b16 %v424
        %v505 = vunpack.c.l.b16 %v425
        %v506 = vunpack.c.h.b16 %v425
        %v507 = vunpack.c.l.b16 %v426
        %v508 = vunpack.c.l.b16 %v427
        %v509 = vunpack.c.h.b16 %v427
        %v510 = vunpack.c.l.b16 %v428
        %v511 = vunpack.c.l.b16 %v429
        %v512 = vunpack.c.h.b16 %v429
        %v513 = vunpack.c.l.b16 %v430
        %v514 = vunpack.c.l.b16 %v431
        %v515 = vunpack.c.h.b16 %v431
        %v516 = vunpack.c.l.b16 %v432
        %v517 = vunpack.c.l.b16 %v433
        %v518 = vunpack.c.h.b16 %v433
        %v519 = vunpack.c.l.b16 %v434
        %v520 = vunpack.c.l.b16 %v435
        %v521 = vunpack.c.h.b16 %v435
        %v522 = vunpack.c.l.b16 %v436
        %v523 = vunpack.c.l.b16 %v437
        %v524 = vunpack.c.h.b16 %v437
        %v525 = vunpack.c.l.b16 %v438
        %v526 = vunpack.c.l.b16 %v439
        %v527 = vunpack.c.h.b16 %v439
        %v528 = vunpack.c.l.b16 %v440
        %v529 = vpack.c.b16 %v484, %v481
        %v530 = vpack.c.b16 %v485, %v482
        %v531 = vpack.c.b16 %v486, %v483
        %v532 = vpack.c.b16 %v490, %v487
        %v533 = vpack.c.b16 %v491, %v488
        %v534 = vpack.c.b16 %v492, %v489
        %v535 = vpack.c.b16 %v496, %v493
        %v536 = vpack.c.b16 %v497, %v494
        %v537 = vpack.c.b16 %v498, %v495
        %v538 = vpack.c.b16 %v502, %v499
        %v539 = vpack.c.b16 %v503, %v500
        %v540 = vpack.c.b16 %v504, %v501
        %v541 = vpack.c.b16 %v508, %v505
        %v542 = vpack.c.b16 %v509, %v506
        %v543 = vpack.c.b16 %v510, %v507
        %v544 = vpack.c.b16 %v514, %v511
        %v545 = vpack.c.b16 %v515, %v512
        %v546 = vpack.c.b16 %v516, %v513
        %v547 = vpack.c.b16 %v520, %v517
        %v548 = vpack.c.b16 %v521, %v518
        %v549 = vpack.c.b16 %v522, %v519
        %v550 = vpack.c.b16 %v526, %v523
        %v551 = vpack.c.b16 %v527, %v524
        %v552 = vpack.c.b16 %v528, %v525
        %577 = vmatpush.bf16.msra.mxu0 %v550
        %578 = vmatpush.bf16.msra.mxu0 %v547
        %579 = vmatpush.bf16.msra.mxu0 %v544
        %580 = vmatpush.bf16.msra.mxu0 %v541
        %581 = vmatpush.bf16.msra.mxu0 %v538
        %582 = vmatpush.bf16.msra.mxu0 %v535
        %583 = vmatpush.bf16.msra.mxu0 %v532
        %584 = vmatpush.bf16.msra.mxu0 %v529
        %585 = vmatmul.bf16.gmra.mxu0 %v405
        %v586 = vpop.f32.mrf.mxu0
        %v587 = vadd.f32 %v443, %v586
        %v588 = vpop.f32.mrf.mxu0
        %v589 = vadd.f32 %v443, %v588
        %590 = vmatmul.bf16.gmra.mxu0 %v406
        %v591 = vpop.f32.mrf.mxu0
        %v592 = vadd.f32 %v443, %v591
        %v593 = vpop.f32.mrf.mxu0
        %v594 = vadd.f32 %v443, %v593
        %595 = vmatmul.bf16.gmra.mxu0 %v407
        %v596 = vpop.f32.mrf.mxu0
        %v597 = vadd.f32 %v443, %v596
        %v598 = vpop.f32.mrf.mxu0
        %v599 = vadd.f32 %v443, %v598
        %600 = vmatmul.bf16.gmra.mxu0 %v408
        %v601 = vpop.f32.mrf.mxu0
        %v602 = vadd.f32 %v443, %v601
        %v603 = vpop.f32.mrf.mxu0
        %v604 = vadd.f32 %v443, %v603
        %605 = vdwg.mxu0
        %606 = vmatpush.bf16.msra.mxu0 %v551
        %607 = vmatpush.bf16.msra.mxu0 %v548
        %608 = vmatpush.bf16.msra.mxu0 %v545
        %609 = vmatpush.bf16.msra.mxu0 %v542
        %610 = vmatpush.bf16.msra.mxu0 %v539
        %611 = vmatpush.bf16.msra.mxu0 %v536
        %612 = vmatpush.bf16.msra.mxu0 %v533
        %613 = vmatpush.bf16.msra.mxu0 %v530
        %614 = vmatmul.bf16.gmra.mxu0 %v405
        %v615 = vpop.f32.mrf.mxu0
        %v616 = vadd.f32 %v444, %v615
        %v617 = vpop.f32.mrf.mxu0
        %v618 = vadd.f32 %v444, %v617
        %619 = vmatmul.bf16.gmra.mxu0 %v406
        %v620 = vpop.f32.mrf.mxu0
        %v621 = vadd.f32 %v444, %v620
        %v622 = vpop.f32.mrf.mxu0
        %v623 = vadd.f32 %v444, %v622
        %624 = vmatmul.bf16.gmra.mxu0 %v407
        %v625 = vpop.f32.mrf.mxu0
        %v626 = vadd.f32 %v444, %v625
        %v627 = vpop.f32.mrf.mxu0
        %v628 = vadd.f32 %v444, %v627
        %629 = vmatmul.bf16.gmra.mxu0 %v408
        %v630 = vpop.f32.mrf.mxu0
        %v631 = vadd.f32 %v444, %v630
        %v632 = vpop.f32.mrf.mxu0
        %v633 = vadd.f32 %v444, %v632
        %634 = vdwg.mxu0
        %635 = vmatpush.bf16.msra.mxu0 %v552
        %636 = vmatpush.bf16.msra.mxu0 %v549
        %637 = vmatpush.bf16.msra.mxu0 %v546
        %638 = vmatpush.bf16.msra.mxu0 %v543
        %639 = vmatpush.bf16.msra.mxu0 %v540
        %640 = vmatpush.bf16.msra.mxu0 %v537
        %641 = vmatpush.bf16.msra.mxu0 %v534
        %642 = vmatpush.bf16.msra.mxu0 %v531
        %643 = vmatmul.bf16.gmra.mxu0 %v405
        %v644 = vpop.f32.mrf.mxu0
        %v645 = vadd.f32 %v445, %v644
        %v646 = vpop.f32.mrf.mxu0
        %v647 = vadd.f32 %v445, %v646
        %648 = vmatmul.bf16.gmra.mxu0 %v406
        %v649 = vpop.f32.mrf.mxu0
        %v650 = vadd.f32 %v445, %v649
        %v651 = vpop.f32.mrf.mxu0
        %v652 = vadd.f32 %v445, %v651
        %653 = vmatmul.bf16.gmra.mxu0 %v407
        %v654 = vpop.f32.mrf.mxu0
        %v655 = vadd.f32 %v445, %v654
        %v656 = vpop.f32.mrf.mxu0
        %v657 = vadd.f32 %v445, %v656
        %658 = vmatmul.bf16.gmra.mxu0 %v408
        %v659 = vpop.f32.mrf.mxu0
        %v660 = vadd.f32 %v445, %v659
        %v661 = vpop.f32.mrf.mxu0
        %v662 = vadd.f32 %v445, %v661
        %663 = vdwg.mxu0
        %664 = vst [vmem:[#allocation3] sm:$0xff] %v587
        %665 = vst [vmem:[#allocation3 + $0x8] sm:$0xff] %v616
        %666 = vst [vmem:[#allocation3 + $0x10] sm:$0xff] %v645
        %667 = vst [vmem:[#allocation3 + $0x18] sm:$0xff] %v589
        %668 = vst [vmem:[#allocation3 + $0x20] sm:$0xff] %v618
        %669 = vst [vmem:[#allocation3 + $0x28] sm:$0xff] %v647
        %670 = vst [vmem:[#allocation3 + $0x30] sm:$0xff] %v592
        %671 = vst [vmem:[#allocation3 + $0x38] sm:$0xff] %v621
        %672 = vst [vmem:[#allocation3 + $0x40] sm:$0xff] %v650
        %673 = vst [vmem:[#allocation3 + $0x48] sm:$0xff] %v594
        %674 = vst [vmem:[#allocation3 + $0x50] sm:$0xff] %v623
        %675 = vst [vmem:[#allocation3 + $0x58] sm:$0xff] %v652
        %676 = vst [vmem:[#allocation3 + $0x60] sm:$0xff] %v597
        %677 = vst [vmem:[#allocation3 + $0x68] sm:$0xff] %v626
        %678 = vst [vmem:[#allocation3 + $0x70] sm:$0xff] %v655
        %679 = vst [vmem:[#allocation3 + $0x78] sm:$0xff] %v599
        %680 = vst [vmem:[#allocation3 + $0x80] sm:$0xff] %v628
        %681 = vst [vmem:[#allocation3 + $0x88] sm:$0xff] %v657
        %682 = vst [vmem:[#allocation3 + $0x90] sm:$0xff] %v602
        %683 = vst [vmem:[#allocation3 + $0x98] sm:$0xff] %v631
        %684 = vst [vmem:[#allocation3 + $0xa0] sm:$0xff] %v660
        %685 = vst [vmem:[#allocation3 + $0xa8] sm:$0xff] %v604
        %686 = vst [vmem:[#allocation3 + $0xb0] sm:$0xff] %v633
        %687 = vst [vmem:[#allocation3 + $0xb8] sm:$0xff] %v662
        %v688 = vld [vmem:[%s321] sm:$0xff]
        %v689 = vld [vmem:[%s321 + $0x8] sm:$0xf]
        %v690 = vld [vmem:[%s321 + $0xc] sm:$0xff]
        %v691 = vld [vmem:[%s321 + $0x14] sm:$0xf]
        %v692 = vld [vmem:[%s321 + $0x18] sm:$0xff]
        %v693 = vld [vmem:[%s321 + $0x20] sm:$0xf]
        %v694 = vld [vmem:[%s321 + $0x24] sm:$0xff]
        %v695 = vld [vmem:[%s321 + $0x2c] sm:$0xf]
        %v696 = vld [vmem:[%s321 + $0x30] sm:$0xff]
        %v697 = vld [vmem:[%s321 + $0x38] sm:$0xf]
        %v698 = vld [vmem:[%s321 + $0x3c] sm:$0xff]
        %v699 = vld [vmem:[%s321 + $0x44] sm:$0xf]
        %v700 = vld [vmem:[%s321 + $0x48] sm:$0xff]
        %v701 = vld [vmem:[%s321 + $0x50] sm:$0xf]
        %v702 = vld [vmem:[%s321 + $0x54] sm:$0xff]
        %v703 = vld [vmem:[%s321 + $0x5c] sm:$0xf]
        %v704 = vld [vmem:[%s321 + $0x60] sm:$0xff]
        %v705 = vld [vmem:[%s321 + $0x68] sm:$0xf]
        %v706 = vld [vmem:[%s321 + $0x6c] sm:$0xff]
        %v707 = vld [vmem:[%s321 + $0x74] sm:$0xf]
        %v708 = vld [vmem:[%s321 + $0x78] sm:$0xff]
        %v709 = vld [vmem:[%s321 + $0x80] sm:$0xf]
        %v710 = vld [vmem:[%s321 + $0x84] sm:$0xff]
        %v711 = vld [vmem:[%s321 + $0x8c] sm:$0xf]
        %v712 = vld [vmem:[%s321 + $0x90] sm:$0xff]
        %v713 = vld [vmem:[%s321 + $0x98] sm:$0xf]
        %v714 = vld [vmem:[%s321 + $0x9c] sm:$0xff]
        %v715 = vld [vmem:[%s321 + $0xa4] sm:$0xf]
        %v716 = vld [vmem:[%s321 + $0xa8] sm:$0xff]
        %v717 = vld [vmem:[%s321 + $0xb0] sm:$0xf]
        %v718 = vld [vmem:[%s321 + $0xb4] sm:$0xff]
        %v719 = vld [vmem:[%s321 + $0xbc] sm:$0xf]
        %v720 = vld [vmem:[#allocation3] sm:$0xff]
        %v721 = vld [vmem:[#allocation3 + $0x8] sm:$0xff]
        %v722 = vld [vmem:[#allocation3 + $0x10] sm:$0xff]
        %v755 = vunpack.c.l.b16 %v688
        %v756 = vunpack.c.h.b16 %v688
        %v757 = vunpack.c.l.b16 %v689
        %v758 = vunpack.c.l.b16 %v690
        %v759 = vunpack.c.h.b16 %v690
        %v760 = vunpack.c.l.b16 %v691
        %v761 = vunpack.c.l.b16 %v692
        %v762 = vunpack.c.h.b16 %v692
        %v763 = vunpack.c.l.b16 %v693
        %v764 = vunpack.c.l.b16 %v694
        %v765 = vunpack.c.h.b16 %v694
        %v766 = vunpack.c.l.b16 %v695
        %v767 = vunpack.c.l.b16 %v696
        %v768 = vunpack.c.h.b16 %v696
        %v769 = vunpack.c.l.b16 %v697
        %v770 = vunpack.c.l.b16 %v698
        %v771 = vunpack.c.h.b16 %v698
        %v772 = vunpack.c.l.b16 %v699
        %v773 = vunpack.c.l.b16 %v700
        %v774 = vunpack.c.h.b16 %v700
        %v775 = vunpack.c.l.b16 %v701
        %v776 = vunpack.c.l.b16 %v702
        %v777 = vunpack.c.h.b16 %v702
        %v778 = vunpack.c.l.b16 %v703
        %v779 = vunpack.c.l.b16 %v704
        %v780 = vunpack.c.h.b16 %v704
        %v781 = vunpack.c.l.b16 %v705
        %v782 = vunpack.c.l.b16 %v706
        %v783 = vunpack.c.h.b16 %v706
        %v784 = vunpack.c.l.b16 %v707
        %v785 = vunpack.c.l.b16 %v708
        %v786 = vunpack.c.h.b16 %v708
        %v787 = vunpack.c.l.b16 %v709
        %v788 = vunpack.c.l.b16 %v710
        %v789 = vunpack.c.h.b16 %v710
        %v790 = vunpack.c.l.b16 %v711
        %v791 = vunpack.c.l.b16 %v712
        %v792 = vunpack.c.h.b16 %v712
        %v793 = vunpack.c.l.b16 %v713
        %v794 = vunpack.c.l.b16 %v714
        %v795 = vunpack.c.h.b16 %v714
        %v796 = vunpack.c.l.b16 %v715
        %v797 = vunpack.c.l.b16 %v716
        %v798 = vunpack.c.h.b16 %v716
        %v799 = vunpack.c.l.b16 %v717
        %v800 = vunpack.c.l.b16 %v718
        %v801 = vunpack.c.h.b16 %v718
        %v802 = vunpack.c.l.b16 %v719
        %v803 = vpack.c.b16 %v758, %v755
        %v804 = vpack.c.b16 %v759, %v756
        %v805 = vpack.c.b16 %v760, %v757
        %v806 = vpack.c.b16 %v764, %v761
        %v807 = vpack.c.b16 %v765, %v762
        %v808 = vpack.c.b16 %v766, %v763
        %v809 = vpack.c.b16 %v770, %v767
        %v810 = vpack.c.b16 %v771, %v768
        %v811 = vpack.c.b16 %v772, %v769
        %v812 = vpack.c.b16 %v776, %v773
        %v813 = vpack.c.b16 %v777, %v774
        %v814 = vpack.c.b16 %v778, %v775
        %v815 = vpack.c.b16 %v782, %v779
        %v816 = vpack.c.b16 %v783, %v780
        %v817 = vpack.c.b16 %v784, %v781
        %v818 = vpack.c.b16 %v788, %v785
        %v819 = vpack.c.b16 %v789, %v786
        %v820 = vpack.c.b16 %v790, %v787
        %v821 = vpack.c.b16 %v794, %v791
        %v822 = vpack.c.b16 %v795, %v792
        %v823 = vpack.c.b16 %v796, %v793
        %v824 = vpack.c.b16 %v800, %v797
        %v825 = vpack.c.b16 %v801, %v798
        %v826 = vpack.c.b16 %v802, %v799
        %851 = vmatpush.bf16.msra.mxu0 %v824
        %852 = vmatpush.bf16.msra.mxu0 %v821
        %853 = vmatpush.bf16.msra.mxu0 %v818
        %854 = vmatpush.bf16.msra.mxu0 %v815
        %855 = vmatpush.bf16.msra.mxu0 %v812
        %856 = vmatpush.bf16.msra.mxu0 %v809
        %857 = vmatpush.bf16.msra.mxu0 %v806
        %858 = vmatpush.bf16.msra.mxu0 %v803
        %859 = vmatmul.bf16.gmra.mxu0 0
        %v860 = vpop.f32.mrf.mxu0
        %v861 = vadd.f32 0.0, %v860
        %v862 = vpop.f32.mrf.mxu0
        %863 = vdwg.mxu0
        %864 = vmatpush.bf16.msra.mxu0 %v825
        %865 = vmatpush.bf16.msra.mxu0 %v822
        %866 = vmatpush.bf16.msra.mxu0 %v819
        %867 = vmatpush.bf16.msra.mxu0 %v816
        %868 = vmatpush.bf16.msra.mxu0 %v813
        %869 = vmatpush.bf16.msra.mxu0 %v810
        %870 = vmatpush.bf16.msra.mxu0 %v807
        %871 = vmatpush.bf16.msra.mxu0 %v804
        %872 = vmatmul.bf16.gmra.mxu0 0
        %v873 = vpop.f32.mrf.mxu0
        %v874 = vadd.f32 0.0, %v873
        %v875 = vpop.f32.mrf.mxu0
        %876 = vdwg.mxu0
        %877 = vmatpush.bf16.msra.mxu0 %v826
        %878 = vmatpush.bf16.msra.mxu0 %v823
        %879 = vmatpush.bf16.msra.mxu0 %v820
        %880 = vmatpush.bf16.msra.mxu0 %v817
        %881 = vmatpush.bf16.msra.mxu0 %v814
        %882 = vmatpush.bf16.msra.mxu0 %v811
        %883 = vmatpush.bf16.msra.mxu0 %v808
        %884 = vmatpush.bf16.msra.mxu0 %v805
        %885 = vmatmul.bf16.gmra.mxu0 0
        %v886 = vpop.f32.mrf.mxu0
        %v887 = vadd.f32 0.0, %v886
        %v888 = vpop.f32.mrf.mxu0
        %889 = vdwg.mxu0
        %v890 = vadd.f32 %v720, %v861
        %v891 = vadd.f32 %v721, %v874
        %v892 = vadd.f32 %v722, %v887
        %vm893 = vcmp.gt.f32.partialorder %v890, 0.0
        %v894 = vsel %vm893, %v376, 0.0
        %vm895 = vcmask 15360
        %v896 = vsel %vm895, %v894, 0.0
        %v897 = vrot.slane %v896, 4
        %v898 = vadd.f32 %v896, %v897
        %v899 = vrot.slane %v898, 2
        %v900 = vadd.f32 %v898, %v899
        %v901 = vrot.slane %v900, 1
        %v902 = vadd.f32 %v900, %v901
        %vm903 = vcmp.lt.f32.partialorder %v902, 1.0
        %vm904 = vcmp.gt.f32.partialorder %v902, 1.0
        %v905 = vsel %vm904, 1, 0
        %906 = vrot.lane.b32.xlu0 %v905, 1
        %v907 = vpop.permute.xlu0 %906
        %vm908 = vcmp.ne.s32.totalorder %v907, 0
        %vm909 = vmand %vm903, %vm908
        %v910 = vsel %vm903, 1, 0
        %911 = vrot.lane.b32.xlu0 %v910, 1
        %v912 = vpop.permute.xlu0 %911
        %vm913 = vcmp.ne.s32.totalorder %v912, 0
        %vm914 = vmand %vm904, %vm913
        %v915 = vsel %vm909, 1, 0
        %v916 = vcvt.s32.f32 %v915
        %v917 = vsel %vm914, 1, 0
        %v918 = vcvt.s32.f32 %v917
        %v919 = vsub.f32 1.0, %v916
        %v920 = vsub.f32 %v919, %v918
        %v921 = vxor.u32 %v891, 2147483648
        %v922 = vmul.f32 %v921, 1.442695
        %v923 = vpow.pop %v922
        %v924 = vadd.f32 %v923, 1.0
        %v925 = vrcp.pop %v924
        %v926 = vmul.f32 %v924, %v925
        %v927 = vsub.f32 1.0, %v926
        %v928 = vmul.f32 %v925, %v927
        %v929 = vadd.f32 %v925, %v928
        %vm930 = vweird.f32 %v924
        %vm931 = vweird.f32 %v925
        %vm932 = vmor %vm930, %vm931
        %v933 = vsel %vm932, %v925, %v929
        %v934 = vand.u32 2147483647, %v924
        %vm935 = vcmp.eq.f32.partialorder %v934, 8.507059e+37
        %v936 = vand.u32 %v924, 2147483648
        %v937 = vor.u32 1.1754944e-38, %v936
        %v938 = vsel %vm935, %v937, %v933
        %v939 = vmul.f32 1.0, %v938
        %940 = vrot.lane.b32.xlu0 %v939, 64
        %v941 = vpop.permute.xlu0 %940
        %v942 = vtanh.pop %v892
        %v943 = vxor.u32 %v892, 2147483648
        %v944 = vmul.f32 %v943, 1.442695
        %v945 = vpow.pop %v944
        %v946 = vadd.f32 %v945, 1.0
        %v947 = vrcp.pop %v946
        %v948 = vmul.f32 %v946, %v947
        %v949 = vsub.f32 1.0, %v948
        %v950 = vmul.f32 %v947, %v949
        %v951 = vadd.f32 %v947, %v950
        %vm952 = vweird.f32 %v946
        %vm953 = vweird.f32 %v947
        %vm954 = vmor %vm952, %vm953
        %v955 = vsel %vm954, %v947, %v951
        %v956 = vand.u32 2147483647, %v946
        %vm957 = vcmp.eq.f32.partialorder %v956, 8.507059e+37
        %v958 = vand.u32 %v946, 2147483648
        %v959 = vor.u32 1.1754944e-38, %v958
        %v960 = vsel %vm957, %v959, %v955
        %v961 = vmul.f32 1.0, %v960
        %962 = vrot.lane.b32.xlu0 %v961, 64
        %v963 = vpop.permute.xlu0 %962
        %v964 = vmul.f32 %v941, 0.0
        %966 = vrot.lane.b32.xlu0 %v916, 127
        %v967 = vpop.permute.xlu0 %966
        %s968 = vtos %v967
        %v969 = vstv %s968
        %v971 = vmul.f32 %v969, %v939
        %v972 = vadd.f32 %v964, %v971
        %974 = vrot.lane.b32.xlu0 %v918, 127
        %v975 = vpop.permute.xlu0 %974
        %s976 = vtos %v975
        %v977 = vstv %s976
        %v979 = vmul.f32 %v977, %v942
        %v980 = vadd.f32 %v972, %v979
        %v981 = vmul.f32 %v939, %v942
        %983 = vrot.lane.b32.xlu0 %v920, 127
        %v984 = vpop.permute.xlu0 %983
        %s985 = vtos %v984
        %v986 = vstv %s985
        %v988 = vmul.f32 %v986, %v981
        %v989 = vadd.f32 %v980, %v988
        %v990 = vtanh.pop %v989
        %v991 = vmul.f32 %v963, %v990
        %992 = vst [vmem:[#allocation2] sm:$0xff] %v991
        %v993 = vld [vmem:[#allocation3 + $0x18] sm:$0xff]
        %v994 = vld [vmem:[#allocation3 + $0x20] sm:$0xff]
        %v995 = vld [vmem:[#allocation3 + $0x28] sm:$0xff]
        %v996 = vpack.c.bf16 %v991, %v991
        %997 = vmatpush.bf16.msra.mxu0 %v824
        %998 = vmatpush.bf16.msra.mxu0 %v821
        %999 = vmatpush.bf16.msra.mxu0 %v818
        %1000 = vmatpush.bf16.msra.mxu0 %v815
        %1001 = vmatpush.bf16.msra.mxu0 %v812
        %1002 = vmatpush.bf16.msra.mxu0 %v809
        %1003 = vmatpush.bf16.msra.mxu0 %v806
        %1004 = vmatpush.bf16.msra.mxu0 %v803
        %1005 = vmatmul.bf16.gmra.mxu0 %v996
        %v1006 = vpop.f32.mrf.mxu0
        %v1007 = vadd.f32 0.0, %v1006
        %v1008 = vpop.f32.mrf.mxu0
        %1009 = vdwg.mxu0
        %1010 = vmatpush.bf16.msra.mxu0 %v825
        %1011 = vmatpush.bf16.msra.mxu0 %v822
        %1012 = vmatpush.bf16.msra.mxu0 %v819
        %1013 = vmatpush.bf16.msra.mxu0 %v816
        %1014 = vmatpush.bf16.msra.mxu0 %v813
        %1015 = vmatpush.bf16.msra.mxu0 %v810
        %1016 = vmatpush.bf16.msra.mxu0 %v807
        %1017 = vmatpush.bf16.msra.mxu0 %v804
        %1018 = vmatmul.bf16.gmra.mxu0 %v996
        %v1019 = vpop.f32.mrf.mxu0
        %v1020 = vadd.f32 0.0, %v1019
        %v1021 = vpop.f32.mrf.mxu0
        %1022 = vdwg.mxu0
        %1023 = vmatpush.bf16.msra.mxu0 %v826
        %1024 = vmatpush.bf16.msra.mxu0 %v823
        %1025 = vmatpush.bf16.msra.mxu0 %v820
        %1026 = vmatpush.bf16.msra.mxu0 %v817
        %1027 = vmatpush.bf16.msra.mxu0 %v814
        %1028 = vmatpush.bf16.msra.mxu0 %v811
        %1029 = vmatpush.bf16.msra.mxu0 %v808
        %1030 = vmatpush.bf16.msra.mxu0 %v805
        %1031 = vmatmul.bf16.gmra.mxu0 %v996
        %v1032 = vpop.f32.mrf.mxu0
        %v1033 = vadd.f32 0.0, %v1032
        %v1034 = vpop.f32.mrf.mxu0
        %1035 = vdwg.mxu0
        %v1036 = vadd.f32 %v993, %v1007
        %v1037 = vadd.f32 %v994, %v1020
        %v1038 = vadd.f32 %v995, %v1033
        %vm1039 = vcmp.gt.f32.partialorder %v1036, 0.0
        %v1040 = vsel %vm1039, %v376, 0.0
        %v1041 = vsel %vm895, %v1040, 0.0
        %v1042 = vrot.slane %v1041, 4
        %v1043 = vadd.f32 %v1041, %v1042
        %v1044 = vrot.slane %v1043, 2
        %v1045 = vadd.f32 %v1043, %v1044
        %v1046 = vrot.slane %v1045, 1
        %v1047 = vadd.f32 %v1045, %v1046
        %vm1048 = vcmp.lt.f32.partialorder %v1047, 1.0
        %vm1049 = vcmp.gt.f32.partialorder %v1047, 1.0
        %v1050 = vsel %vm1049, 1, 0
        %1051 = vrot.lane.b32.xlu0 %v1050, 1
        %v1052 = vpop.permute.xlu0 %1051
        %vm1053 = vcmp.ne.s32.totalorder %v1052, 0
        %vm1054 = vmand %vm1048, %vm1053
        %v1055 = vsel %vm1048, 1, 0
        %1056 = vrot.lane.b32.xlu0 %v1055, 1
        %v1057 = vpop.permute.xlu0 %1056
        %vm1058 = vcmp.ne.s32.totalorder %v1057, 0
        %vm1059 = vmand %vm1049, %vm1058
        %v1060 = vsel %vm1054, 1, 0
        %v1061 = vcvt.s32.f32 %v1060
        %v1062 = vsel %vm1059, 1, 0
        %v1063 = vcvt.s32.f32 %v1062
        %v1064 = vsub.f32 1.0, %v1061
        %v1065 = vsub.f32 %v1064, %v1063
        %v1066 = vxor.u32 %v1037, 2147483648
        %v1067 = vmul.f32 %v1066, 1.442695
        %v1068 = vpow.pop %v1067
        %v1069 = vadd.f32 %v1068, 1.0
        %v1070 = vrcp.pop %v1069
        %v1071 = vmul.f32 %v1069, %v1070
        %v1072 = vsub.f32 1.0, %v1071
        %v1073 = vmul.f32 %v1070, %v1072
        %v1074 = vadd.f32 %v1070, %v1073
        %vm1075 = vweird.f32 %v1069
        %vm1076 = vweird.f32 %v1070
        %vm1077 = vmor %vm1075, %vm1076
        %v1078 = vsel %vm1077, %v1070, %v1074
        %v1079 = vand.u32 2147483647, %v1069
        %vm1080 = vcmp.eq.f32.partialorder %v1079, 8.507059e+37
        %v1081 = vand.u32 %v1069, 2147483648
        %v1082 = vor.u32 1.1754944e-38, %v1081
        %v1083 = vsel %vm1080, %v1082, %v1078
        %v1084 = vmul.f32 1.0, %v1083
        %1085 = vrot.lane.b32.xlu0 %v1084, 64
        %v1086 = vpop.permute.xlu0 %1085
        %v1087 = vtanh.pop %v1038
        %v1088 = vxor.u32 %v1038, 2147483648
        %v1089 = vmul.f32 %v1088, 1.442695
        %v1090 = vpow.pop %v1089
        %v1091 = vadd.f32 %v1090, 1.0
        %v1092 = vrcp.pop %v1091
        %v1093 = vmul.f32 %v1091, %v1092
        %v1094 = vsub.f32 1.0, %v1093
        %v1095 = vmul.f32 %v1092, %v1094
        %v1096 = vadd.f32 %v1092, %v1095
        %vm1097 = vweird.f32 %v1091
        %vm1098 = vweird.f32 %v1092
        %vm1099 = vmor %vm1097, %vm1098
        %v1100 = vsel %vm1099, %v1092, %v1096
        %v1101 = vand.u32 2147483647, %v1091
        %vm1102 = vcmp.eq.f32.partialorder %v1101, 8.507059e+37
        %v1103 = vand.u32 %v1091, 2147483648
        %v1104 = vor.u32 1.1754944e-38, %v1103
        %v1105 = vsel %vm1102, %v1104, %v1100
        %v1106 = vmul.f32 1.0, %v1105
        %1107 = vrot.lane.b32.xlu0 %v1106, 64
        %v1108 = vpop.permute.xlu0 %1107
        %v1109 = vmul.f32 %v1086, %v989
        %1111 = vrot.lane.b32.xlu0 %v1061, 127
        %v1112 = vpop.permute.xlu0 %1111
        %s1113 = vtos %v1112
        %v1114 = vstv %s1113
        %v1116 = vmul.f32 %v1114, %v1084
        %v1117 = vadd.f32 %v1109, %v1116
        %1119 = vrot.lane.b32.xlu0 %v1063, 127
        %v1120 = vpop.permute.xlu0 %1119
        %s1121 = vtos %v1120
        %v1122 = vstv %s1121
        %v1124 = vmul.f32 %v1122, %v1087
        %v1125 = vadd.f32 %v1117, %v1124
        %v1126 = vmul.f32 %v1084, %v1087
        %1128 = vrot.lane.b32.xlu0 %v1065, 127
        %v1129 = vpop.permute.xlu0 %1128
        %s1130 = vtos %v1129
        %v1131 = vstv %s1130
        %v1133 = vmul.f32 %v1131, %v1126
        %v1134 = vadd.f32 %v1125, %v1133
        %v1135 = vtanh.pop %v1134
        %v1136 = vmul.f32 %v1108, %v1135
        %1137 = vst [vmem:[#allocation2 + $0x8] sm:$0xff] %v1136
        %v1138 = vld [vmem:[#allocation3 + $0x30] sm:$0xff]
        %v1139 = vld [vmem:[#allocation3 + $0x38] sm:$0xff]
        %v1140 = vld [vmem:[#allocation3 + $0x40] sm:$0xff]
        %v1141 = vpack.c.bf16 %v1136, %v1136
        %1142 = vmatpush.bf16.msra.mxu0 %v824
        %1143 = vmatpush.bf16.msra.mxu0 %v821
        %1144 = vmatpush.bf16.msra.mxu0 %v818
        %1145 = vmatpush.bf16.msra.mxu0 %v815
        %1146 = vmatpush.bf16.msra.mxu0 %v812
        %1147 = vmatpush.bf16.msra.mxu0 %v809
        %1148 = vmatpush.bf16.msra.mxu0 %v806
        %1149 = vmatpush.bf16.msra.mxu0 %v803
        %1150 = vmatmul.bf16.gmra.mxu0 %v1141
        %v1151 = vpop.f32.mrf.mxu0
        %v1152 = vadd.f32 0.0, %v1151
        %v1153 = vpop.f32.mrf.mxu0
        %1154 = vdwg.mxu0
        %1155 = vmatpush.bf16.msra.mxu0 %v825
        %1156 = vmatpush.bf16.msra.mxu0 %v822
        %1157 = vmatpush.bf16.msra.mxu0 %v819
        %1158 = vmatpush.bf16.msra.mxu0 %v816
        %1159 = vmatpush.bf16.msra.mxu0 %v813
        %1160 = vmatpush.bf16.msra.mxu0 %v810
        %1161 = vmatpush.bf16.msra.mxu0 %v807
        %1162 = vmatpush.bf16.msra.mxu0 %v804
        %1163 = vmatmul.bf16.gmra.mxu0 %v1141
        %v1164 = vpop.f32.mrf.mxu0
        %v1165 = vadd.f32 0.0, %v1164
        %v1166 = vpop.f32.mrf.mxu0
        %1167 = vdwg.mxu0
        %1168 = vmatpush.bf16.msra.mxu0 %v826
        %1169 = vmatpush.bf16.msra.mxu0 %v823
        %1170 = vmatpush.bf16.msra.mxu0 %v820
        %1171 = vmatpush.bf16.msra.mxu0 %v817
        %1172 = vmatpush.bf16.msra.mxu0 %v814
        %1173 = vmatpush.bf16.msra.mxu0 %v811
        %1174 = vmatpush.bf16.msra.mxu0 %v808
        %1175 = vmatpush.bf16.msra.mxu0 %v805
        %1176 = vmatmul.bf16.gmra.mxu0 %v1141
        %v1177 = vpop.f32.mrf.mxu0
        %v1178 = vadd.f32 0.0, %v1177
        %v1179 = vpop.f32.mrf.mxu0
        %1180 = vdwg.mxu0
        %v1181 = vadd.f32 %v1138, %v1152
        %v1182 = vadd.f32 %v1139, %v1165
        %v1183 = vadd.f32 %v1140, %v1178
        %vm1184 = vcmp.gt.f32.partialorder %v1181, 0.0
        %v1185 = vsel %vm1184, %v376, 0.0
        %v1186 = vsel %vm895, %v1185, 0.0
        %v1187 = vrot.slane %v1186, 4
        %v1188 = vadd.f32 %v1186, %v1187
        %v1189 = vrot.slane %v1188, 2
        %v1190 = vadd.f32 %v1188, %v1189
        %v1191 = vrot.slane %v1190, 1
        %v1192 = vadd.f32 %v1190, %v1191
        %vm1193 = vcmp.lt.f32.partialorder %v1192, 1.0
        %vm1194 = vcmp.gt.f32.partialorder %v1192, 1.0
        %v1195 = vsel %vm1194, 1, 0
        %1196 = vrot.lane.b32.xlu0 %v1195, 1
        %v1197 = vpop.permute.xlu0 %1196
        %vm1198 = vcmp.ne.s32.totalorder %v1197, 0
        %vm1199 = vmand %vm1193, %vm1198
        %v1200 = vsel %vm1193, 1, 0
        %1201 = vrot.lane.b32.xlu0 %v1200, 1
        %v1202 = vpop.permute.xlu0 %1201
        %vm1203 = vcmp.ne.s32.totalorder %v1202, 0
        %vm1204 = vmand %vm1194, %vm1203
        %v1205 = vsel %vm1199, 1, 0
        %v1206 = vcvt.s32.f32 %v1205
        %v1207 = vsel %vm1204, 1, 0
        %v1208 = vcvt.s32.f32 %v1207
        %v1209 = vsub.f32 1.0, %v1206
        %v1210 = vsub.f32 %v1209, %v1208
        %v1211 = vxor.u32 %v1182, 2147483648
        %v1212 = vmul.f32 %v1211, 1.442695
        %v1213 = vpow.pop %v1212
        %v1214 = vadd.f32 %v1213, 1.0
        %v1215 = vrcp.pop %v1214
        %v1216 = vmul.f32 %v1214, %v1215
        %v1217 = vsub.f32 1.0, %v1216
        %v1218 = vmul.f32 %v1215, %v1217
        %v1219 = vadd.f32 %v1215, %v1218
        %vm1220 = vweird.f32 %v1214
        %vm1221 = vweird.f32 %v1215
        %vm1222 = vmor %vm1220, %vm1221
        %v1223 = vsel %vm1222, %v1215, %v1219
        %v1224 = vand.u32 2147483647, %v1214
        %vm1225 = vcmp.eq.f32.partialorder %v1224, 8.507059e+37
        %v1226 = vand.u32 %v1214, 2147483648
        %v1227 = vor.u32 1.1754944e-38, %v1226
        %v1228 = vsel %vm1225, %v1227, %v1223
        %v1229 = vmul.f32 1.0, %v1228
        %1230 = vrot.lane.b32.xlu0 %v1229, 64
        %v1231 = vpop.permute.xlu0 %1230
        %v1232 = vtanh.pop %v1183
        %v1233 = vxor.u32 %v1183, 2147483648
        %v1234 = vmul.f32 %v1233, 1.442695
        %v1235 = vpow.pop %v1234
        %v1236 = vadd.f32 %v1235, 1.0
        %v1237 = vrcp.pop %v1236
        %v1238 = vmul.f32 %v1236, %v1237
        %v1239 = vsub.f32 1.0, %v1238
        %v1240 = vmul.f32 %v1237, %v1239
        %v1241 = vadd.f32 %v1237, %v1240
        %vm1242 = vweird.f32 %v1236
        %vm1243 = vweird.f32 %v1237
        %vm1244 = vmor %vm1242, %vm1243
        %v1245 = vsel %vm1244, %v1237, %v1241
        %v1246 = vand.u32 2147483647, %v1236
        %vm1247 = vcmp.eq.f32.partialorder %v1246, 8.507059e+37
        %v1248 = vand.u32 %v1236, 2147483648
        %v1249 = vor.u32 1.1754944e-38, %v1248
        %v1250 = vsel %vm1247, %v1249, %v1245
        %v1251 = vmul.f32 1.0, %v1250
        %1252 = vrot.lane.b32.xlu0 %v1251, 64
        %v1253 = vpop.permute.xlu0 %1252
        %v1254 = vmul.f32 %v1231, %v1134
        %1256 = vrot.lane.b32.xlu0 %v1206, 127
        %v1257 = vpop.permute.xlu0 %1256
        %s1258 = vtos %v1257
        %v1259 = vstv %s1258
        %v1261 = vmul.f32 %v1259, %v1229
        %v1262 = vadd.f32 %v1254, %v1261
        %1264 = vrot.lane.b32.xlu0 %v1208, 127
        %v1265 = vpop.permute.xlu0 %1264
        %s1266 = vtos %v1265
        %v1267 = vstv %s1266
        %v1269 = vmul.f32 %v1267, %v1232
        %v1270 = vadd.f32 %v1262, %v1269
        %v1271 = vmul.f32 %v1229, %v1232
        %1273 = vrot.lane.b32.xlu0 %v1210, 127
        %v1274 = vpop.permute.xlu0 %1273
        %s1275 = vtos %v1274
        %v1276 = vstv %s1275
        %v1278 = vmul.f32 %v1276, %v1271
        %v1279 = vadd.f32 %v1270, %v1278
        %v1280 = vtanh.pop %v1279
        %v1281 = vmul.f32 %v1253, %v1280
        %1282 = vst [vmem:[#allocation2 + $0x10] sm:$0xff] %v1281
        %v1283 = vld [vmem:[#allocation3 + $0x48] sm:$0xff]
        %v1284 = vld [vmem:[#allocation3 + $0x50] sm:$0xff]
        %v1285 = vld [vmem:[#allocation3 + $0x58] sm:$0xff]
        %v1286 = vpack.c.bf16 %v1281, %v1281
        %1287 = vmatpush.bf16.msra.mxu0 %v824
        %1288 = vmatpush.bf16.msra.mxu0 %v821
        %1289 = vmatpush.bf16.msra.mxu0 %v818
        %1290 = vmatpush.bf16.msra.mxu0 %v815
        %1291 = vmatpush.bf16.msra.mxu0 %v812
        %1292 = vmatpush.bf16.msra.mxu0 %v809
        %1293 = vmatpush.bf16.msra.mxu0 %v806
        %1294 = vmatpush.bf16.msra.mxu0 %v803
        %1295 = vmatmul.bf16.gmra.mxu0 %v1286
        %v1296 = vpop.f32.mrf.mxu0
        %v1297 = vadd.f32 0.0, %v1296
        %v1298 = vpop.f32.mrf.mxu0
        %1299 = vdwg.mxu0
        %1300 = vmatpush.bf16.msra.mxu0 %v825
        %1301 = vmatpush.bf16.msra.mxu0 %v822
        %1302 = vmatpush.bf16.msra.mxu0 %v819
        %1303 = vmatpush.bf16.msra.mxu0 %v816
        %1304 = vmatpush.bf16.msra.mxu0 %v813
        %1305 = vmatpush.bf16.msra.mxu0 %v810
        %1306 = vmatpush.bf16.msra.mxu0 %v807
        %1307 = vmatpush.bf16.msra.mxu0 %v804
        %1308 = vmatmul.bf16.gmra.mxu0 %v1286
        %v1309 = vpop.f32.mrf.mxu0
        %v1310 = vadd.f32 0.0, %v1309
        %v1311 = vpop.f32.mrf.mxu0
        %1312 = vdwg.mxu0
        %1313 = vmatpush.bf16.msra.mxu0 %v826
        %1314 = vmatpush.bf16.msra.mxu0 %v823
        %1315 = vmatpush.bf16.msra.mxu0 %v820
        %1316 = vmatpush.bf16.msra.mxu0 %v817
        %1317 = vmatpush.bf16.msra.mxu0 %v814
        %1318 = vmatpush.bf16.msra.mxu0 %v811
        %1319 = vmatpush.bf16.msra.mxu0 %v808
        %1320 = vmatpush.bf16.msra.mxu0 %v805
        %1321 = vmatmul.bf16.gmra.mxu0 %v1286
        %v1322 = vpop.f32.mrf.mxu0
        %v1323 = vadd.f32 0.0, %v1322
        %v1324 = vpop.f32.mrf.mxu0
        %1325 = vdwg.mxu0
        %v1326 = vadd.f32 %v1283, %v1297
        %v1327 = vadd.f32 %v1284, %v1310
        %v1328 = vadd.f32 %v1285, %v1323
        %vm1329 = vcmp.gt.f32.partialorder %v1326, 0.0
        %v1330 = vsel %vm1329, %v376, 0.0
        %v1331 = vsel %vm895, %v1330, 0.0
        %v1332 = vrot.slane %v1331, 4
        %v1333 = vadd.f32 %v1331, %v1332
        %v1334 = vrot.slane %v1333, 2
        %v1335 = vadd.f32 %v1333, %v1334
        %v1336 = vrot.slane %v1335, 1
        %v1337 = vadd.f32 %v1335, %v1336
        %vm1338 = vcmp.lt.f32.partialorder %v1337, 1.0
        %vm1339 = vcmp.gt.f32.partialorder %v1337, 1.0
        %v1340 = vsel %vm1339, 1, 0
        %1341 = vrot.lane.b32.xlu0 %v1340, 1
        %v1342 = vpop.permute.xlu0 %1341
        %vm1343 = vcmp.ne.s32.totalorder %v1342, 0
        %vm1344 = vmand %vm1338, %vm1343
        %v1345 = vsel %vm1338, 1, 0
        %1346 = vrot.lane.b32.xlu0 %v1345, 1
        %v1347 = vpop.permute.xlu0 %1346
        %vm1348 = vcmp.ne.s32.totalorder %v1347, 0
        %vm1349 = vmand %vm1339, %vm1348
        %v1350 = vsel %vm1344, 1, 0
        %v1351 = vcvt.s32.f32 %v1350
        %v1352 = vsel %vm1349, 1, 0
        %v1353 = vcvt.s32.f32 %v1352
        %v1354 = vsub.f32 1.0, %v1351
        %v1355 = vsub.f32 %v1354, %v1353
        %v1356 = vxor.u32 %v1327, 2147483648
        %v1357 = vmul.f32 %v1356, 1.442695
        %v1358 = vpow.pop %v1357
        %v1359 = vadd.f32 %v1358, 1.0
        %v1360 = vrcp.pop %v1359
        %v1361 = vmul.f32 %v1359, %v1360
        %v1362 = vsub.f32 1.0, %v1361
        %v1363 = vmul.f32 %v1360, %v1362
        %v1364 = vadd.f32 %v1360, %v1363
        %vm1365 = vweird.f32 %v1359
        %vm1366 = vweird.f32 %v1360
        %vm1367 = vmor %vm1365, %vm1366
        %v1368 = vsel %vm1367, %v1360, %v1364
        %v1369 = vand.u32 2147483647, %v1359
        %vm1370 = vcmp.eq.f32.partialorder %v1369, 8.507059e+37
        %v1371 = vand.u32 %v1359, 2147483648
        %v1372 = vor.u32 1.1754944e-38, %v1371
        %v1373 = vsel %vm1370, %v1372, %v1368
        %v1374 = vmul.f32 1.0, %v1373
        %1375 = vrot.lane.b32.xlu0 %v1374, 64
        %v1376 = vpop.permute.xlu0 %1375
        %v1377 = vtanh.pop %v1328
        %v1378 = vxor.u32 %v1328, 2147483648
        %v1379 = vmul.f32 %v1378, 1.442695
        %v1380 = vpow.pop %v1379
        %v1381 = vadd.f32 %v1380, 1.0
        %v1382 = vrcp.pop %v1381
        %v1383 = vmul.f32 %v1381, %v1382
        %v1384 = vsub.f32 1.0, %v1383
        %v1385 = vmul.f32 %v1382, %v1384
        %v1386 = vadd.f32 %v1382, %v1385
        %vm1387 = vweird.f32 %v1381
        %vm1388 = vweird.f32 %v1382
        %vm1389 = vmor %vm1387, %vm1388
        %v1390 = vsel %vm1389, %v1382, %v1386
        %v1391 = vand.u32 2147483647, %v1381
        %vm1392 = vcmp.eq.f32.partialorder %v1391, 8.507059e+37
        %v1393 = vand.u32 %v1381, 2147483648
        %v1394 = vor.u32 1.1754944e-38, %v1393
        %v1395 = vsel %vm1392, %v1394, %v1390
        %v1396 = vmul.f32 1.0, %v1395
        %1397 = vrot.lane.b32.xlu0 %v1396, 64
        %v1398 = vpop.permute.xlu0 %1397
        %v1399 = vmul.f32 %v1376, %v1279
        %1401 = vrot.lane.b32.xlu0 %v1351, 127
        %v1402 = vpop.permute.xlu0 %1401
        %s1403 = vtos %v1402
        %v1404 = vstv %s1403
        %v1406 = vmul.f32 %v1404, %v1374
        %v1407 = vadd.f32 %v1399, %v1406
        %1409 = vrot.lane.b32.xlu0 %v1353, 127
        %v1410 = vpop.permute.xlu0 %1409
        %s1411 = vtos %v1410
        %v1412 = vstv %s1411
        %v1414 = vmul.f32 %v1412, %v1377
        %v1415 = vadd.f32 %v1407, %v1414
        %v1416 = vmul.f32 %v1374, %v1377
        %1418 = vrot.lane.b32.xlu0 %v1355, 127
        %v1419 = vpop.permute.xlu0 %1418
        %s1420 = vtos %v1419
        %v1421 = vstv %s1420
        %v1423 = vmul.f32 %v1421, %v1416
        %v1424 = vadd.f32 %v1415, %v1423
        %v1425 = vtanh.pop %v1424
        %v1426 = vmul.f32 %v1398, %v1425
        %1427 = vst [vmem:[#allocation2 + $0x18] sm:$0xff] %v1426
        %v1428 = vld [vmem:[#allocation3 + $0x60] sm:$0xff]
        %v1429 = vld [vmem:[#allocation3 + $0x68] sm:$0xff]
        %v1430 = vld [vmem:[#allocation3 + $0x70] sm:$0xff]
        %v1431 = vpack.c.bf16 %v1426, %v1426
        %1432 = vmatpush.bf16.msra.mxu0 %v824
        %1433 = vmatpush.bf16.msra.mxu0 %v821
        %1434 = vmatpush.bf16.msra.mxu0 %v818
        %1435 = vmatpush.bf16.msra.mxu0 %v815
        %1436 = vmatpush.bf16.msra.mxu0 %v812
        %1437 = vmatpush.bf16.msra.mxu0 %v809
        %1438 = vmatpush.bf16.msra.mxu0 %v806
        %1439 = vmatpush.bf16.msra.mxu0 %v803
        %1440 = vmatmul.bf16.gmra.mxu0 %v1431
        %v1441 = vpop.f32.mrf.mxu0
        %v1442 = vadd.f32 0.0, %v1441
        %v1443 = vpop.f32.mrf.mxu0
        %1444 = vdwg.mxu0
        %1445 = vmatpush.bf16.msra.mxu0 %v825
        %1446 = vmatpush.bf16.msra.mxu0 %v822
        %1447 = vmatpush.bf16.msra.mxu0 %v819
        %1448 = vmatpush.bf16.msra.mxu0 %v816
        %1449 = vmatpush.bf16.msra.mxu0 %v813
        %1450 = vmatpush.bf16.msra.mxu0 %v810
        %1451 = vmatpush.bf16.msra.mxu0 %v807
        %1452 = vmatpush.bf16.msra.mxu0 %v804
        %1453 = vmatmul.bf16.gmra.mxu0 %v1431
        %v1454 = vpop.f32.mrf.mxu0
        %v1455 = vadd.f32 0.0, %v1454
        %v1456 = vpop.f32.mrf.mxu0
        %1457 = vdwg.mxu0
        %1458 = vmatpush.bf16.msra.mxu0 %v826
        %1459 = vmatpush.bf16.msra.mxu0 %v823
        %1460 = vmatpush.bf16.msra.mxu0 %v820
        %1461 = vmatpush.bf16.msra.mxu0 %v817
        %1462 = vmatpush.bf16.msra.mxu0 %v814
        %1463 = vmatpush.bf16.msra.mxu0 %v811
        %1464 = vmatpush.bf16.msra.mxu0 %v808
        %1465 = vmatpush.bf16.msra.mxu0 %v805
        %1466 = vmatmul.bf16.gmra.mxu0 %v1431
        %v1467 = vpop.f32.mrf.mxu0
        %v1468 = vadd.f32 0.0, %v1467
        %v1469 = vpop.f32.mrf.mxu0
        %1470 = vdwg.mxu0
        %v1471 = vadd.f32 %v1428, %v1442
        %v1472 = vadd.f32 %v1429, %v1455
        %v1473 = vadd.f32 %v1430, %v1468
        %vm1474 = vcmp.gt.f32.partialorder %v1471, 0.0
        %v1475 = vsel %vm1474, %v376, 0.0
        %v1476 = vsel %vm895, %v1475, 0.0
        %v1477 = vrot.slane %v1476, 4
        %v1478 = vadd.f32 %v1476, %v1477
        %v1479 = vrot.slane %v1478, 2
        %v1480 = vadd.f32 %v1478, %v1479
        %v1481 = vrot.slane %v1480, 1
        %v1482 = vadd.f32 %v1480, %v1481
        %vm1483 = vcmp.lt.f32.partialorder %v1482, 1.0
        %vm1484 = vcmp.gt.f32.partialorder %v1482, 1.0
        %v1485 = vsel %vm1484, 1, 0
        %1486 = vrot.lane.b32.xlu0 %v1485, 1
        %v1487 = vpop.permute.xlu0 %1486
        %vm1488 = vcmp.ne.s32.totalorder %v1487, 0
        %vm1489 = vmand %vm1483, %vm1488
        %v1490 = vsel %vm1483, 1, 0
        %1491 = vrot.lane.b32.xlu0 %v1490, 1
        %v1492 = vpop.permute.xlu0 %1491
        %vm1493 = vcmp.ne.s32.totalorder %v1492, 0
        %vm1494 = vmand %vm1484, %vm1493
        %v1495 = vsel %vm1489, 1, 0
        %v1496 = vcvt.s32.f32 %v1495
        %v1497 = vsel %vm1494, 1, 0
        %v1498 = vcvt.s32.f32 %v1497
        %v1499 = vsub.f32 1.0, %v1496
        %v1500 = vsub.f32 %v1499, %v1498
        %v1501 = vxor.u32 %v1472, 2147483648
        %v1502 = vmul.f32 %v1501, 1.442695
        %v1503 = vpow.pop %v1502
        %v1504 = vadd.f32 %v1503, 1.0
        %v1505 = vrcp.pop %v1504
        %v1506 = vmul.f32 %v1504, %v1505
        %v1507 = vsub.f32 1.0, %v1506
        %v1508 = vmul.f32 %v1505, %v1507
        %v1509 = vadd.f32 %v1505, %v1508
        %vm1510 = vweird.f32 %v1504
        %vm1511 = vweird.f32 %v1505
        %vm1512 = vmor %vm1510, %vm1511
        %v1513 = vsel %vm1512, %v1505, %v1509
        %v1514 = vand.u32 2147483647, %v1504
        %vm1515 = vcmp.eq.f32.partialorder %v1514, 8.507059e+37
        %v1516 = vand.u32 %v1504, 2147483648
        %v1517 = vor.u32 1.1754944e-38, %v1516
        %v1518 = vsel %vm1515, %v1517, %v1513
        %v1519 = vmul.f32 1.0, %v1518
        %1520 = vrot.lane.b32.xlu0 %v1519, 64
        %v1521 = vpop.permute.xlu0 %1520
        %v1522 = vtanh.pop %v1473
        %v1523 = vxor.u32 %v1473, 2147483648
        %v1524 = vmul.f32 %v1523, 1.442695
        %v1525 = vpow.pop %v1524
        %v1526 = vadd.f32 %v1525, 1.0
        %v1527 = vrcp.pop %v1526
        %v1528 = vmul.f32 %v1526, %v1527
        %v1529 = vsub.f32 1.0, %v1528
        %v1530 = vmul.f32 %v1527, %v1529
        %v1531 = vadd.f32 %v1527, %v1530
        %vm1532 = vweird.f32 %v1526
        %vm1533 = vweird.f32 %v1527
        %vm1534 = vmor %vm1532, %vm1533
        %v1535 = vsel %vm1534, %v1527, %v1531
        %v1536 = vand.u32 2147483647, %v1526
        %vm1537 = vcmp.eq.f32.partialorder %v1536, 8.507059e+37
        %v1538 = vand.u32 %v1526, 2147483648
        %v1539 = vor.u32 1.1754944e-38, %v1538
        %v1540 = vsel %vm1537, %v1539, %v1535
        %v1541 = vmul.f32 1.0, %v1540
        %1542 = vrot.lane.b32.xlu0 %v1541, 64
        %v1543 = vpop.permute.xlu0 %1542
        %v1544 = vmul.f32 %v1521, %v1424
        %1546 = vrot.lane.b32.xlu0 %v1496, 127
        %v1547 = vpop.permute.xlu0 %1546
        %s1548 = vtos %v1547
        %v1549 = vstv %s1548
        %v1551 = vmul.f32 %v1549, %v1519
        %v1552 = vadd.f32 %v1544, %v1551
        %1554 = vrot.lane.b32.xlu0 %v1498, 127
        %v1555 = vpop.permute.xlu0 %1554
        %s1556 = vtos %v1555
        %v1557 = vstv %s1556
        %v1559 = vmul.f32 %v1557, %v1522
        %v1560 = vadd.f32 %v1552, %v1559
        %v1561 = vmul.f32 %v1519, %v1522
        %1563 = vrot.lane.b32.xlu0 %v1500, 127
        %v1564 = vpop.permute.xlu0 %1563
        %s1565 = vtos %v1564
        %v1566 = vstv %s1565
        %v1568 = vmul.f32 %v1566, %v1561
        %v1569 = vadd.f32 %v1560, %v1568
        %v1570 = vtanh.pop %v1569
        %v1571 = vmul.f32 %v1543, %v1570
        %1572 = vst [vmem:[#allocation2 + $0x20] sm:$0xff] %v1571
        %v1573 = vld [vmem:[#allocation3 + $0x78] sm:$0xff]
        %v1574 = vld [vmem:[#allocation3 + $0x80] sm:$0xff]
        %v1575 = vld [vmem:[#allocation3 + $0x88] sm:$0xff]
        %v1576 = vpack.c.bf16 %v1571, %v1571
        %1577 = vmatpush.bf16.msra.mxu0 %v824
        %1578 = vmatpush.bf16.msra.mxu0 %v821
        %1579 = vmatpush.bf16.msra.mxu0 %v818
        %1580 = vmatpush.bf16.msra.mxu0 %v815
        %1581 = vmatpush.bf16.msra.mxu0 %v812
        %1582 = vmatpush.bf16.msra.mxu0 %v809
        %1583 = vmatpush.bf16.msra.mxu0 %v806
        %1584 = vmatpush.bf16.msra.mxu0 %v803
        %1585 = vmatmul.bf16.gmra.mxu0 %v1576
        %v1586 = vpop.f32.mrf.mxu0
        %v1587 = vadd.f32 0.0, %v1586
        %v1588 = vpop.f32.mrf.mxu0
        %1589 = vdwg.mxu0
        %1590 = vmatpush.bf16.msra.mxu0 %v825
        %1591 = vmatpush.bf16.msra.mxu0 %v822
        %1592 = vmatpush.bf16.msra.mxu0 %v819
        %1593 = vmatpush.bf16.msra.mxu0 %v816
        %1594 = vmatpush.bf16.msra.mxu0 %v813
        %1595 = vmatpush.bf16.msra.mxu0 %v810
        %1596 = vmatpush.bf16.msra.mxu0 %v807
        %1597 = vmatpush.bf16.msra.mxu0 %v804
        %1598 = vmatmul.bf16.gmra.mxu0 %v1576
        %v1599 = vpop.f32.mrf.mxu0
        %v1600 = vadd.f32 0.0, %v1599
        %v1601 = vpop.f32.mrf.mxu0
        %1602 = vdwg.mxu0
        %1603 = vmatpush.bf16.msra.mxu0 %v826
        %1604 = vmatpush.bf16.msra.mxu0 %v823
        %1605 = vmatpush.bf16.msra.mxu0 %v820
        %1606 = vmatpush.bf16.msra.mxu0 %v817
        %1607 = vmatpush.bf16.msra.mxu0 %v814
        %1608 = vmatpush.bf16.msra.mxu0 %v811
        %1609 = vmatpush.bf16.msra.mxu0 %v808
        %1610 = vmatpush.bf16.msra.mxu0 %v805
        %1611 = vmatmul.bf16.gmra.mxu0 %v1576
        %v1612 = vpop.f32.mrf.mxu0
        %v1613 = vadd.f32 0.0, %v1612
        %v1614 = vpop.f32.mrf.mxu0
        %1615 = vdwg.mxu0
        %v1616 = vadd.f32 %v1573, %v1587
        %v1617 = vadd.f32 %v1574, %v1600
        %v1618 = vadd.f32 %v1575, %v1613
        %vm1619 = vcmp.gt.f32.partialorder %v1616, 0.0
        %v1620 = vsel %vm1619, %v376, 0.0
        %v1621 = vsel %vm895, %v1620, 0.0
        %v1622 = vrot.slane %v1621, 4
        %v1623 = vadd.f32 %v1621, %v1622
        %v1624 = vrot.slane %v1623, 2
        %v1625 = vadd.f32 %v1623, %v1624
        %v1626 = vrot.slane %v1625, 1
        %v1627 = vadd.f32 %v1625, %v1626
        %vm1628 = vcmp.lt.f32.partialorder %v1627, 1.0
        %vm1629 = vcmp.gt.f32.partialorder %v1627, 1.0
        %v1630 = vsel %vm1629, 1, 0
        %1631 = vrot.lane.b32.xlu0 %v1630, 1
        %v1632 = vpop.permute.xlu0 %1631
        %vm1633 = vcmp.ne.s32.totalorder %v1632, 0
        %vm1634 = vmand %vm1628, %vm1633
        %v1635 = vsel %vm1628, 1, 0
        %1636 = vrot.lane.b32.xlu0 %v1635, 1
        %v1637 = vpop.permute.xlu0 %1636
        %vm1638 = vcmp.ne.s32.totalorder %v1637, 0
        %vm1639 = vmand %vm1629, %vm1638
        %v1640 = vsel %vm1634, 1, 0
        %v1641 = vcvt.s32.f32 %v1640
        %v1642 = vsel %vm1639, 1, 0
        %v1643 = vcvt.s32.f32 %v1642
        %v1644 = vsub.f32 1.0, %v1641
        %v1645 = vsub.f32 %v1644, %v1643
        %v1646 = vxor.u32 %v1617, 2147483648
        %v1647 = vmul.f32 %v1646, 1.442695
        %v1648 = vpow.pop %v1647
        %v1649 = vadd.f32 %v1648, 1.0
        %v1650 = vrcp.pop %v1649
        %v1651 = vmul.f32 %v1649, %v1650
        %v1652 = vsub.f32 1.0, %v1651
        %v1653 = vmul.f32 %v1650, %v1652
        %v1654 = vadd.f32 %v1650, %v1653
        %vm1655 = vweird.f32 %v1649
        %vm1656 = vweird.f32 %v1650
        %vm1657 = vmor %vm1655, %vm1656
        %v1658 = vsel %vm1657, %v1650, %v1654
        %v1659 = vand.u32 2147483647, %v1649
        %vm1660 = vcmp.eq.f32.partialorder %v1659, 8.507059e+37
        %v1661 = vand.u32 %v1649, 2147483648
        %v1662 = vor.u32 1.1754944e-38, %v1661
        %v1663 = vsel %vm1660, %v1662, %v1658
        %v1664 = vmul.f32 1.0, %v1663
        %1665 = vrot.lane.b32.xlu0 %v1664, 64
        %v1666 = vpop.permute.xlu0 %1665
        %v1667 = vtanh.pop %v1618
        %v1668 = vxor.u32 %v1618, 2147483648
        %v1669 = vmul.f32 %v1668, 1.442695
        %v1670 = vpow.pop %v1669
        %v1671 = vadd.f32 %v1670, 1.0
        %v1672 = vrcp.pop %v1671
        %v1673 = vmul.f32 %v1671, %v1672
        %v1674 = vsub.f32 1.0, %v1673
        %v1675 = vmul.f32 %v1672, %v1674
        %v1676 = vadd.f32 %v1672, %v1675
        %vm1677 = vweird.f32 %v1671
        %vm1678 = vweird.f32 %v1672
        %vm1679 = vmor %vm1677, %vm1678
        %v1680 = vsel %vm1679, %v1672, %v1676
        %v1681 = vand.u32 2147483647, %v1671
        %vm1682 = vcmp.eq.f32.partialorder %v1681, 8.507059e+37
        %v1683 = vand.u32 %v1671, 2147483648
        %v1684 = vor.u32 1.1754944e-38, %v1683
        %v1685 = vsel %vm1682, %v1684, %v1680
        %v1686 = vmul.f32 1.0, %v1685
        %1687 = vrot.lane.b32.xlu0 %v1686, 64
        %v1688 = vpop.permute.xlu0 %1687
        %v1689 = vmul.f32 %v1666, %v1569
        %1691 = vrot.lane.b32.xlu0 %v1641, 127
        %v1692 = vpop.permute.xlu0 %1691
        %s1693 = vtos %v1692
        %v1694 = vstv %s1693
        %v1696 = vmul.f32 %v1694, %v1664
        %v1697 = vadd.f32 %v1689, %v1696
        %1699 = vrot.lane.b32.xlu0 %v1643, 127
        %v1700 = vpop.permute.xlu0 %1699
        %s1701 = vtos %v1700
        %v1702 = vstv %s1701
        %v1704 = vmul.f32 %v1702, %v1667
        %v1705 = vadd.f32 %v1697, %v1704
        %v1706 = vmul.f32 %v1664, %v1667
        %1708 = vrot.lane.b32.xlu0 %v1645, 127
        %v1709 = vpop.permute.xlu0 %1708
        %s1710 = vtos %v1709
        %v1711 = vstv %s1710
        %v1713 = vmul.f32 %v1711, %v1706
        %v1714 = vadd.f32 %v1705, %v1713
        %v1715 = vtanh.pop %v1714
        %v1716 = vmul.f32 %v1688, %v1715
        %1717 = vst [vmem:[#allocation2 + $0x28] sm:$0xff] %v1716
        %v1718 = vld [vmem:[#allocation3 + $0x90] sm:$0xff]
        %v1719 = vld [vmem:[#allocation3 + $0x98] sm:$0xff]
        %v1720 = vld [vmem:[#allocation3 + $0xa0] sm:$0xff]
        %v1721 = vpack.c.bf16 %v1716, %v1716
        %1722 = vmatpush.bf16.msra.mxu0 %v824
        %1723 = vmatpush.bf16.msra.mxu0 %v821
        %1724 = vmatpush.bf16.msra.mxu0 %v818
        %1725 = vmatpush.bf16.msra.mxu0 %v815
        %1726 = vmatpush.bf16.msra.mxu0 %v812
        %1727 = vmatpush.bf16.msra.mxu0 %v809
        %1728 = vmatpush.bf16.msra.mxu0 %v806
        %1729 = vmatpush.bf16.msra.mxu0 %v803
        %1730 = vmatmul.bf16.gmra.mxu0 %v1721
        %v1731 = vpop.f32.mrf.mxu0
        %v1732 = vadd.f32 0.0, %v1731
        %v1733 = vpop.f32.mrf.mxu0
        %1734 = vdwg.mxu0
        %1735 = vmatpush.bf16.msra.mxu0 %v825
        %1736 = vmatpush.bf16.msra.mxu0 %v822
        %1737 = vmatpush.bf16.msra.mxu0 %v819
        %1738 = vmatpush.bf16.msra.mxu0 %v816
        %1739 = vmatpush.bf16.msra.mxu0 %v813
        %1740 = vmatpush.bf16.msra.mxu0 %v810
        %1741 = vmatpush.bf16.msra.mxu0 %v807
        %1742 = vmatpush.bf16.msra.mxu0 %v804
        %1743 = vmatmul.bf16.gmra.mxu0 %v1721
        %v1744 = vpop.f32.mrf.mxu0
        %v1745 = vadd.f32 0.0, %v1744
        %v1746 = vpop.f32.mrf.mxu0
        %1747 = vdwg.mxu0
        %1748 = vmatpush.bf16.msra.mxu0 %v826
        %1749 = vmatpush.bf16.msra.mxu0 %v823
        %1750 = vmatpush.bf16.msra.mxu0 %v820
        %1751 = vmatpush.bf16.msra.mxu0 %v817
        %1752 = vmatpush.bf16.msra.mxu0 %v814
        %1753 = vmatpush.bf16.msra.mxu0 %v811
        %1754 = vmatpush.bf16.msra.mxu0 %v808
        %1755 = vmatpush.bf16.msra.mxu0 %v805
        %1756 = vmatmul.bf16.gmra.mxu0 %v1721
        %v1757 = vpop.f32.mrf.mxu0
        %v1758 = vadd.f32 0.0, %v1757
        %v1759 = vpop.f32.mrf.mxu0
        %1760 = vdwg.mxu0
        %v1761 = vadd.f32 %v1718, %v1732
        %v1762 = vadd.f32 %v1719, %v1745
        %v1763 = vadd.f32 %v1720, %v1758
        %vm1764 = vcmp.gt.f32.partialorder %v1761, 0.0
        %v1765 = vsel %vm1764, %v376, 0.0
        %v1766 = vsel %vm895, %v1765, 0.0
        %v1767 = vrot.slane %v1766, 4
        %v1768 = vadd.f32 %v1766, %v1767
        %v1769 = vrot.slane %v1768, 2
        %v1770 = vadd.f32 %v1768, %v1769
        %v1771 = vrot.slane %v1770, 1
        %v1772 = vadd.f32 %v1770, %v1771
        %vm1773 = vcmp.lt.f32.partialorder %v1772, 1.0
        %vm1774 = vcmp.gt.f32.partialorder %v1772, 1.0
        %v1775 = vsel %vm1774, 1, 0
        %1776 = vrot.lane.b32.xlu0 %v1775, 1
        %v1777 = vpop.permute.xlu0 %1776
        %vm1778 = vcmp.ne.s32.totalorder %v1777, 0
        %vm1779 = vmand %vm1773, %vm1778
        %v1780 = vsel %vm1773, 1, 0
        %1781 = vrot.lane.b32.xlu0 %v1780, 1
        %v1782 = vpop.permute.xlu0 %1781
        %vm1783 = vcmp.ne.s32.totalorder %v1782, 0
        %vm1784 = vmand %vm1774, %vm1783
        %v1785 = vsel %vm1779, 1, 0
        %v1786 = vcvt.s32.f32 %v1785
        %v1787 = vsel %vm1784, 1, 0
        %v1788 = vcvt.s32.f32 %v1787
        %v1789 = vsub.f32 1.0, %v1786
        %v1790 = vsub.f32 %v1789, %v1788
        %v1791 = vxor.u32 %v1762, 2147483648
        %v1792 = vmul.f32 %v1791, 1.442695
        %v1793 = vpow.pop %v1792
        %v1794 = vadd.f32 %v1793, 1.0
        %v1795 = vrcp.pop %v1794
        %v1796 = vmul.f32 %v1794, %v1795
        %v1797 = vsub.f32 1.0, %v1796
        %v1798 = vmul.f32 %v1795, %v1797
        %v1799 = vadd.f32 %v1795, %v1798
        %vm1800 = vweird.f32 %v1794
        %vm1801 = vweird.f32 %v1795
        %vm1802 = vmor %vm1800, %vm1801
        %v1803 = vsel %vm1802, %v1795, %v1799
        %v1804 = vand.u32 2147483647, %v1794
        %vm1805 = vcmp.eq.f32.partialorder %v1804, 8.507059e+37
        %v1806 = vand.u32 %v1794, 2147483648
        %v1807 = vor.u32 1.1754944e-38, %v1806
        %v1808 = vsel %vm1805, %v1807, %v1803
        %v1809 = vmul.f32 1.0, %v1808
        %1810 = vrot.lane.b32.xlu0 %v1809, 64
        %v1811 = vpop.permute.xlu0 %1810
        %v1812 = vtanh.pop %v1763
        %v1813 = vxor.u32 %v1763, 2147483648
        %v1814 = vmul.f32 %v1813, 1.442695
        %v1815 = vpow.pop %v1814
        %v1816 = vadd.f32 %v1815, 1.0
        %v1817 = vrcp.pop %v1816
        %v1818 = vmul.f32 %v1816, %v1817
        %v1819 = vsub.f32 1.0, %v1818
        %v1820 = vmul.f32 %v1817, %v1819
        %v1821 = vadd.f32 %v1817, %v1820
        %vm1822 = vweird.f32 %v1816
        %vm1823 = vweird.f32 %v1817
        %vm1824 = vmor %vm1822, %vm1823
        %v1825 = vsel %vm1824, %v1817, %v1821
        %v1826 = vand.u32 2147483647, %v1816
        %vm1827 = vcmp.eq.f32.partialorder %v1826, 8.507059e+37
        %v1828 = vand.u32 %v1816, 2147483648
        %v1829 = vor.u32 1.1754944e-38, %v1828
        %v1830 = vsel %vm1827, %v1829, %v1825
        %v1831 = vmul.f32 1.0, %v1830
        %1832 = vrot.lane.b32.xlu0 %v1831, 64
        %v1833 = vpop.permute.xlu0 %1832
        %v1834 = vmul.f32 %v1811, %v1714
        %1836 = vrot.lane.b32.xlu0 %v1786, 127
        %v1837 = vpop.permute.xlu0 %1836
        %s1838 = vtos %v1837
        %v1839 = vstv %s1838
        %v1841 = vmul.f32 %v1839, %v1809
        %v1842 = vadd.f32 %v1834, %v1841
        %1844 = vrot.lane.b32.xlu0 %v1788, 127
        %v1845 = vpop.permute.xlu0 %1844
        %s1846 = vtos %v1845
        %v1847 = vstv %s1846
        %v1849 = vmul.f32 %v1847, %v1812
        %v1850 = vadd.f32 %v1842, %v1849
        %v1851 = vmul.f32 %v1809, %v1812
        %1853 = vrot.lane.b32.xlu0 %v1790, 127
        %v1854 = vpop.permute.xlu0 %1853
        %s1855 = vtos %v1854
        %v1856 = vstv %s1855
        %v1858 = vmul.f32 %v1856, %v1851
        %v1859 = vadd.f32 %v1850, %v1858
        %v1860 = vtanh.pop %v1859
        %v1861 = vmul.f32 %v1833, %v1860
        %1862 = vst [vmem:[#allocation2 + $0x30] sm:$0xff] %v1861
        %v1863 = vld [vmem:[#allocation3 + $0xa8] sm:$0xff]
        %v1864 = vld [vmem:[#allocation3 + $0xb0] sm:$0xff]
        %v1865 = vld [vmem:[#allocation3 + $0xb8] sm:$0xff]
        %v1866 = vpack.c.bf16 %v1861, %v1861
        %1867 = vmatpush.bf16.msra.mxu0 %v824
        %1868 = vmatpush.bf16.msra.mxu0 %v821
        %1869 = vmatpush.bf16.msra.mxu0 %v818
        %1870 = vmatpush.bf16.msra.mxu0 %v815
        %1871 = vmatpush.bf16.msra.mxu0 %v812
        %1872 = vmatpush.bf16.msra.mxu0 %v809
        %1873 = vmatpush.bf16.msra.mxu0 %v806
        %1874 = vmatpush.bf16.msra.mxu0 %v803
        %1875 = vmatmul.bf16.gmra.mxu0 %v1866
        %v1876 = vpop.f32.mrf.mxu0
        %v1877 = vadd.f32 0.0, %v1876
        %v1878 = vpop.f32.mrf.mxu0
        %1879 = vdwg.mxu0
        %1880 = vmatpush.bf16.msra.mxu0 %v825
        %1881 = vmatpush.bf16.msra.mxu0 %v822
        %1882 = vmatpush.bf16.msra.mxu0 %v819
        %1883 = vmatpush.bf16.msra.mxu0 %v816
        %1884 = vmatpush.bf16.msra.mxu0 %v813
        %1885 = vmatpush.bf16.msra.mxu0 %v810
        %1886 = vmatpush.bf16.msra.mxu0 %v807
        %1887 = vmatpush.bf16.msra.mxu0 %v804
        %1888 = vmatmul.bf16.gmra.mxu0 %v1866
        %v1889 = vpop.f32.mrf.mxu0
        %v1890 = vadd.f32 0.0, %v1889
        %v1891 = vpop.f32.mrf.mxu0
        %1892 = vdwg.mxu0
        %1893 = vmatpush.bf16.msra.mxu0 %v826
        %1894 = vmatpush.bf16.msra.mxu0 %v823
        %1895 = vmatpush.bf16.msra.mxu0 %v820
        %1896 = vmatpush.bf16.msra.mxu0 %v817
        %1897 = vmatpush.bf16.msra.mxu0 %v814
        %1898 = vmatpush.bf16.msra.mxu0 %v811
        %1899 = vmatpush.bf16.msra.mxu0 %v808
        %1900 = vmatpush.bf16.msra.mxu0 %v805
        %1901 = vmatmul.bf16.gmra.mxu0 %v1866
        %v1902 = vpop.f32.mrf.mxu0
        %v1903 = vadd.f32 0.0, %v1902
        %v1904 = vpop.f32.mrf.mxu0
        %1905 = vdwg.mxu0
        %v1906 = vadd.f32 %v1863, %v1877
        %v1907 = vadd.f32 %v1864, %v1890
        %v1908 = vadd.f32 %v1865, %v1903
        %vm1909 = vcmp.gt.f32.partialorder %v1906, 0.0
        %v1910 = vsel %vm1909, %v376, 0.0
        %v1911 = vsel %vm895, %v1910, 0.0
        %v1912 = vrot.slane %v1911, 4
        %v1913 = vadd.f32 %v1911, %v1912
        %v1914 = vrot.slane %v1913, 2
        %v1915 = vadd.f32 %v1913, %v1914
        %v1916 = vrot.slane %v1915, 1
        %v1917 = vadd.f32 %v1915, %v1916
        %vm1918 = vcmp.lt.f32.partialorder %v1917, 1.0
        %vm1919 = vcmp.gt.f32.partialorder %v1917, 1.0
        %v1920 = vsel %vm1919, 1, 0
        %1921 = vrot.lane.b32.xlu0 %v1920, 1
        %v1922 = vpop.permute.xlu0 %1921
        %vm1923 = vcmp.ne.s32.totalorder %v1922, 0
        %vm1924 = vmand %vm1918, %vm1923
        %v1925 = vsel %vm1918, 1, 0
        %1926 = vrot.lane.b32.xlu0 %v1925, 1
        %v1927 = vpop.permute.xlu0 %1926
        %vm1928 = vcmp.ne.s32.totalorder %v1927, 0
        %vm1929 = vmand %vm1919, %vm1928
        %v1930 = vsel %vm1924, 1, 0
        %v1931 = vcvt.s32.f32 %v1930
        %v1932 = vsel %vm1929, 1, 0
        %v1933 = vcvt.s32.f32 %v1932
        %v1934 = vsub.f32 1.0, %v1931
        %v1935 = vsub.f32 %v1934, %v1933
        %v1936 = vxor.u32 %v1907, 2147483648
        %v1937 = vmul.f32 %v1936, 1.442695
        %v1938 = vpow.pop %v1937
        %v1939 = vadd.f32 %v1938, 1.0
        %v1940 = vrcp.pop %v1939
        %v1941 = vmul.f32 %v1939, %v1940
        %v1942 = vsub.f32 1.0, %v1941
        %v1943 = vmul.f32 %v1940, %v1942
        %v1944 = vadd.f32 %v1940, %v1943
        %vm1945 = vweird.f32 %v1939
        %vm1946 = vweird.f32 %v1940
        %vm1947 = vmor %vm1945, %vm1946
        %v1948 = vsel %vm1947, %v1940, %v1944
        %v1949 = vand.u32 2147483647, %v1939
        %vm1950 = vcmp.eq.f32.partialorder %v1949, 8.507059e+37
        %v1951 = vand.u32 %v1939, 2147483648
        %v1952 = vor.u32 1.1754944e-38, %v1951
        %v1953 = vsel %vm1950, %v1952, %v1948
        %v1954 = vmul.f32 1.0, %v1953
        %1955 = vrot.lane.b32.xlu0 %v1954, 64
        %v1956 = vpop.permute.xlu0 %1955
        %v1957 = vtanh.pop %v1908
        %v1958 = vxor.u32 %v1908, 2147483648
        %v1959 = vmul.f32 %v1958, 1.442695
        %v1960 = vpow.pop %v1959
        %v1961 = vadd.f32 %v1960, 1.0
        %v1962 = vrcp.pop %v1961
        %v1963 = vmul.f32 %v1961, %v1962
        %v1964 = vsub.f32 1.0, %v1963
        %v1965 = vmul.f32 %v1962, %v1964
        %v1966 = vadd.f32 %v1962, %v1965
        %vm1967 = vweird.f32 %v1961
        %vm1968 = vweird.f32 %v1962
        %vm1969 = vmor %vm1967, %vm1968
        %v1970 = vsel %vm1969, %v1962, %v1966
        %v1971 = vand.u32 2147483647, %v1961
        %vm1972 = vcmp.eq.f32.partialorder %v1971, 8.507059e+37
        %v1973 = vand.u32 %v1961, 2147483648
        %v1974 = vor.u32 1.1754944e-38, %v1973
        %v1975 = vsel %vm1972, %v1974, %v1970
        %v1976 = vmul.f32 1.0, %v1975
        %1977 = vrot.lane.b32.xlu0 %v1976, 64
        %v1978 = vpop.permute.xlu0 %1977
        %v1979 = vmul.f32 %v1956, %v1859
        %1981 = vrot.lane.b32.xlu0 %v1931, 127
        %v1982 = vpop.permute.xlu0 %1981
        %s1983 = vtos %v1982
        %v1984 = vstv %s1983
        %v1986 = vmul.f32 %v1984, %v1954
        %v1987 = vadd.f32 %v1979, %v1986
        %1989 = vrot.lane.b32.xlu0 %v1933, 127
        %v1990 = vpop.permute.xlu0 %1989
        %s1991 = vtos %v1990
        %v1992 = vstv %s1991
        %v1994 = vmul.f32 %v1992, %v1957
        %v1995 = vadd.f32 %v1987, %v1994
        %v1996 = vmul.f32 %v1954, %v1957
        %1998 = vrot.lane.b32.xlu0 %v1935, 127
        %v1999 = vpop.permute.xlu0 %1998
        %s2000 = vtos %v1999
        %v2001 = vstv %s2000
        %v2003 = vmul.f32 %v2001, %v1996
        %v2004 = vadd.f32 %v1995, %v2003
        %v2005 = vtanh.pop %v2004
        %v2006 = vmul.f32 %v1978, %v2005
        %2007 = vst [vmem:[#allocation2 + $0x38] sm:$0xff] %v2006
        %p2008 = scmp.eq.s32.totalorder %s25, 2
        // Predicated region
        $region69: #{tpu_custom_call.1} parent=43 // pred_check
          %p2009 = pneg %p2008
        $region70: #{tpu_custom_call.1} parent=43 // pred_check_branch
          %2011 = sbr.rel (%p2009) target = $region72
        $region71: #{tpu_custom_call.1} parent=43 // pred_region
          %v2012 = vpack.c.bf16 %v2006, %v2006
          %v2013 = vld [vmem:[#allocation12] sm:$0xf]
          %v2014 = vld [vmem:[#allocation12 + $0x4] sm:$0xf]
          %v2015 = vld [vmem:[#allocation12 + $0x8] sm:$0xf]
          %v2016 = vld [vmem:[#allocation12 + $0xc] sm:$0xf]
          %v2017 = vld [vmem:[#allocation12 + $0x10] sm:$0xf]
          %v2018 = vld [vmem:[#allocation12 + $0x14] sm:$0xf]
          %v2019 = vld [vmem:[#allocation12 + $0x18] sm:$0xf]
          %v2020 = vld [vmem:[#allocation12 + $0x1c] sm:$0xf]
          %v2021 = vld [vmem:[#allocation12 + $0x20] sm:$0xf]
          %v2022 = vld [vmem:[#allocation12 + $0x24] sm:$0xf]
          %v2023 = vld [vmem:[#allocation12 + $0x28] sm:$0xf]
          %v2024 = vld [vmem:[#allocation12 + $0x2c] sm:$0xf]
          %v2025 = vld [vmem:[#allocation12 + $0x30] sm:$0xf]
          %v2026 = vld [vmem:[#allocation12 + $0x34] sm:$0xf]
          %v2027 = vld [vmem:[#allocation12 + $0x38] sm:$0xf]
          %v2028 = vld [vmem:[#allocation12 + $0x3c] sm:$0xf]
          %v2029 = vld [vmem:[%s5] sm:$0x1]
          %v2031 = vperm.slane %v2029, 0
          %v2049 = vunpack.c.l.b16 %v2013
          %v2050 = vunpack.c.l.b16 %v2014
          %v2051 = vunpack.c.l.b16 %v2015
          %v2052 = vunpack.c.l.b16 %v2016
          %v2053 = vunpack.c.l.b16 %v2017
          %v2054 = vunpack.c.l.b16 %v2018
          %v2055 = vunpack.c.l.b16 %v2019
          %v2056 = vunpack.c.l.b16 %v2020
          %v2057 = vunpack.c.l.b16 %v2021
          %v2058 = vunpack.c.l.b16 %v2022
          %v2059 = vunpack.c.l.b16 %v2023
          %v2060 = vunpack.c.l.b16 %v2024
          %v2061 = vunpack.c.l.b16 %v2025
          %v2062 = vunpack.c.l.b16 %v2026
          %v2063 = vunpack.c.l.b16 %v2027
          %v2064 = vunpack.c.l.b16 %v2028
          %v2065 = vpack.c.b16 %v2050, %v2049
          %v2066 = vpack.c.b16 %v2052, %v2051
          %v2067 = vpack.c.b16 %v2054, %v2053
          %v2068 = vpack.c.b16 %v2056, %v2055
          %v2069 = vpack.c.b16 %v2058, %v2057
          %v2070 = vpack.c.b16 %v2060, %v2059
          %v2071 = vpack.c.b16 %v2062, %v2061
          %v2072 = vpack.c.b16 %v2064, %v2063
          %2081 = vmatpush.bf16.msra.mxu0 %v2072
          %2082 = vmatpush.bf16.msra.mxu0 %v2071
          %2083 = vmatpush.bf16.msra.mxu0 %v2070
          %2084 = vmatpush.bf16.msra.mxu0 %v2069
          %2085 = vmatpush.bf16.msra.mxu0 %v2068
          %2086 = vmatpush.bf16.msra.mxu0 %v2067
          %2087 = vmatpush.bf16.msra.mxu0 %v2066
          %2088 = vmatpush.bf16.msra.mxu0 %v2065
          %2089 = vmatmul.bf16.gmra.mxu0 %v2012
          %v2090 = vpop.f32.mrf.mxu0
          %v2091 = vadd.f32 %v2031, %v2090
          %v2092 = vpop.f32.mrf.mxu0
          %2093 = vdwg.mxu0
          %2094 = vst [vmem:[#allocation13] sm:$0xff] %v2091
        $region72: #{tpu_custom_call.1} parent=43 // pred_fallthru
          _
        // Predicated region
        $region73: #{tpu_custom_call.1} parent=43 // pred_check
          %p2095 = pneg %p179
        $region74: #{tpu_custom_call.1} parent=43 // pred_check_branch
          %2097 = sbr.rel (%p2095) target = $region76
        $region75: #{tpu_custom_call.1} parent=43 // pred_region
          %2099 = vsyncadd [#allocation6], 0
          %s2101 = sshll.u32 [#allocation13], 4
          %s2102 = int_to_ptr.vmem [resolvable:$true] %s2101
          %s2103 = sshll.u32 %s6, 4
          %s2104 = int_to_ptr.hbm [resolvable:$true] %s2103
          %2106 = dma.vmem_to_hbm [thread:$0]  %s2102, 128, %s2104, [#allocation6]
        $region76: #{tpu_custom_call.1} parent=43 // pred_fallthru
          _
        // Predicated region
        $region77: #{tpu_custom_call.1} parent=43 // pred_check
          %p2107 = pneg %p179
        $region78: #{tpu_custom_call.1} parent=43 // pred_check_branch
          %2109 = sbr.rel (%p2107) target = $region80
        $region79: #{tpu_custom_call.1} parent=43 // pred_region
          %2111 = dma.done [#allocation6], 128
        $region80: #{tpu_custom_call.1} parent=43 // pred_fallthru
          _
      $region44: #{tpu_custom_call.1} parent=5 // pred_fallthru
        _
      %p2112 = scmp.le.s32.totalorder 2, %s20
      // Predicated region
      $region81: #{tpu_custom_call.1} parent=5 // pred_check
        %p2113 = pneg %p2112
      $region82: #{tpu_custom_call.1} parent=5 // pred_check_branch
        %2115 = sbr.rel (%p2113) target = $region84
      $region83: #{tpu_custom_call.1} parent=5 // pred_region
        %s2116 = ssub.s32 %s20, 2
      $region84: #{tpu_custom_call.1} parent=5 // pred_fallthru
        _
    $region6: #{tpu_custom_call.1} parent=1 // loop_footer
      %s24 = sadd.s32 1, %s20
    $region7: #{tpu_custom_call.1} parent=1 // loop_footer_branch
      %19 = sbr.rel target = $region3
    $region8: #{tpu_custom_call.1} parent=1 // loop_exit
      _
    %2117 = vsyncpa [#allocation5], 1
    %s2118 = scalar_lea.sflag [#allocation5], 1
    %2119 = vsyncpa %s2118, 1
    %2120 = vsyncpa [#allocation8], 1
    %s2121 = scalar_lea.sflag [#allocation8], 1
    %2122 = vsyncpa %s2121, 1
    %2123 = vsyncpa [#allocation11], 1
    %s2124 = scalar_lea.sflag [#allocation11], 1
    %2125 = vsyncpa %s2124, 1
    %2126 = vsyncpa [#allocation6], 1
    %s2127 = scalar_lea.sflag [#allocation6], 1
    %2128 = vsyncpa %s2127, 1

</llo_original>
